<compile_context>
chip_gen: v7x
topology: tpu7x:2x2x1
jax: 0.10.0
libtpu: 0.0.40
codegen_flags: <defaults>
</compile_context>

<pallas_src>
import math

import numpy as np
import jax
import jax.numpy as jnp
from jax.experimental import pallas as pl
from jax.experimental.pallas import tpu as pltpu


# ---------------------------------------------------------------------------
# Interpolation matrix matching F.interpolate(mode='bilinear',
# align_corners=False, antialias=False).
# ---------------------------------------------------------------------------
def _interp_matrix(out_size, in_size):
    m = np.zeros((out_size, in_size), dtype=np.float32)
    scale = in_size / out_size
    for i in range(out_size):
        src = max((i + 0.5) * scale - 0.5, 0.0)
        i0 = min(int(np.floor(src)), in_size - 1)
        i1 = min(i0 + 1, in_size - 1)
        w1 = src - i0
        m[i, i0] += 1.0 - w1
        m[i, i1] += w1
    return m


def _median3x3(xpad, H, W):
    """3x3 median of a reflect-padded (H+2, W+2) plane -> (H, W).
    Paeth min/max network (19 compare/exchange) -- pure VPU elementwise."""
    p = [xpad[dy:dy + H, dx:dx + W] for dy in range(3) for dx in range(3)]

    def srt(i, j):
        p[i], p[j] = jnp.minimum(p[i], p[j]), jnp.maximum(p[i], p[j])

    srt(1, 2); srt(4, 5); srt(7, 8)
    srt(0, 1); srt(3, 4); srt(6, 7)
    srt(1, 2); srt(4, 5); srt(7, 8)
    srt(0, 3); srt(5, 8); srt(4, 7)
    srt(3, 6); srt(1, 4); srt(2, 5)
    srt(4, 7); srt(4, 2); srt(6, 4)
    srt(4, 2)
    return p[4]


# ---------------------------------------------------------------------------
# Kernel 1: fused logo pipeline (one pallas_call, grid=()).
#   median3x3 -> x*contrast + brightness + noise -> clamp -> contour mask
#   -> separable bilinear resize with the paste offset EMBEDDED in the
#   matrices -> where(patch==0, target, patch).
# ---------------------------------------------------------------------------
def _make_logo_kernel(C, H, W, th, tw):
    def kernel(scal_ref, logo_ref, noise_ref, contour_ref, wr_ref, wct_ref,
               tgt_ref, o_ref):
        contrast = scal_ref[0]
        brightness = scal_ref[1]
        contour = contour_ref[...]                       # (H, W)

        masked = []
        for c in range(C):                               # C is tiny & static
            med = _median3x3(logo_ref[c], H, W)          # (H, W)
            u = med * contrast + brightness + noise_ref[c]
            u = jnp.clip(u, 1e-07, 0.9999999)
            masked.append(jnp.where(contour == 0.0, jnp.zeros_like(u), u))

        # batched col pass over all channels (single MXU matmul), then the
        # per-channel row pass.  Rows/cols of wr/wct outside the paste window
        # are all-zero -> exact 0.0 == the zero padding of PyTorch paste().
        ucat = jnp.concatenate(masked, axis=0)           # (C*H, W)
        vcat = jnp.dot(ucat, wct_ref[...],
                       preferred_element_type=jnp.float32)   # (C*H, tw)
        wr = wr_ref[...]                                 # (th, H)
        for c in range(C):
            padded = jnp.dot(wr, vcat[c * H:(c + 1) * H, :],
                             preferred_element_type=jnp.float32)  # (th, tw)
            o_ref[c] = jnp.where(padded == 0.0, tgt_ref[c], padded)
    return kernel


def fused_logo_pipeline(logo, noise, contour_np, contrast, brightness, target,
                        lh, lw, h_pos, w_pos):
    """logo/noise: (C,H,W); contour_np: (H,W) numpy; target: (C,th,tw)."""
    C, H, W = logo.shape
    th, tw = int(target.shape[1]), int(target.shape[2])

    # PyTorch paste(): top pad = (th - lh) - h_pos, left pad = w_pos.
    row_off = (th - lh) - h_pos
    col_off = w_pos
    wr_full = np.zeros((th, H), np.float32)
    wr_full[row_off:row_off + lh, :] = _interp_matrix(lh, H)
    wct_full = np.zeros((W, tw), np.float32)
    wct_full[:, col_off:col_off + lw] = _interp_matrix(lw, W).T

    scal = jnp.stack([jnp.asarray(contrast, jnp.float32),
                      jnp.asarray(brightness, jnp.float32)])
    logo_p = jnp.pad(logo.astype(jnp.float32), ((0, 0), (1, 1), (1, 1)),
                     mode="reflect")

    vmem = pltpu.MemorySpace.VMEM
    kernel = _make_logo_kernel(C, H, W, th, tw)
    return pl.pallas_call(
        kernel,
        out_shape=jax.ShapeDtypeStruct((C, th, tw), jnp.float32),
        in_specs=[pl.BlockSpec(memory_space=pltpu.MemorySpace.SMEM),  # scalars
                  pl.BlockSpec(memory_space=vmem),
                  pl.BlockSpec(memory_space=vmem),
                  pl.BlockSpec(memory_space=vmem),
                  pl.BlockSpec(memory_space=vmem),
                  pl.BlockSpec(memory_space=vmem),
                  pl.BlockSpec(memory_space=vmem)],
        out_specs=pl.BlockSpec(memory_space=vmem),
    )(scal, logo_p, noise.astype(jnp.float32),
      jnp.asarray(contour_np, jnp.float32),
      jnp.asarray(wr_full), jnp.asarray(wct_full),
      target.astype(jnp.float32))


# ---------------------------------------------------------------------------
# Kernel 2: fused augment (4 sequential where-pastes) + final bilinear resize
# to (model_h, model_w) -- one pallas_call, grid=().
# ---------------------------------------------------------------------------
def _make_augment_kernel(Nb, C, bh, bw, R, mh, mw):
    def kernel(bk_ref, rot_ref, wr_ref, wct_ref, o_ref):
        bg = bk_ref[...]                                 # (Nb, C, bh, bw)
        for r in range(R):                               # order matters
            img = jnp.broadcast_to(rot_ref[r][None], bg.shape)
            bg = jnp.where(img == 0.0, bg, img)

        # fused final bilinear resize: batched col pass + per-plane row pass.
        wr = wr_ref[...]                                 # (mh, bh)
        wct = wct_ref[...]                               # (bw, mw)
        planes = [bg[n, c] for n in range(Nb) for c in range(C)]
        stacked = jnp.concatenate(planes, axis=0)        # (Nb*C*bh, bw)
        v = jnp.dot(stacked, wct,
                    preferred_element_type=jnp.float32)  # (Nb*C*bh, mw)
        i = 0
        for n in range(Nb):
            for c in range(C):
                vp = v[i * bh:(i + 1) * bh, :]
                o_ref[n, c] = jnp.dot(wr, vp,
                                      preferred_element_type=jnp.float32)
                i += 1
    return kernel


def fused_augment_resize(bk_image, padded_rot, mh, mw):
    """bk_image: (Nb,C,bh,bw); padded_rot: (R,C,bh,bw) already zero-padded to
    the background frame at the per-rotation paste positions."""
    Nb, C, bh, bw = bk_image.shape
    R = padded_rot.shape[0]
    wr = jnp.asarray(_interp_matrix(mh, bh))
    wct = jnp.asarray(_interp_matrix(mw, bw).T)
    vmem = pltpu.MemorySpace.VMEM
    kernel = _make_augment_kernel(Nb, C, bh, bw, R, mh, mw)
    return pl.pallas_call(
        kernel,
        out_shape=jax.ShapeDtypeStruct((Nb, C, mh, mw), jnp.float32),
        in_specs=[pl.BlockSpec(memory_space=vmem) for _ in range(4)],
        out_specs=pl.BlockSpec(memory_space=vmem),
    )(bk_image.astype(jnp.float32), padded_rot.astype(jnp.float32), wr, wct)


# ---------------------------------------------------------------------------
# Rotation: F.affine_grid + F.grid_sample (bilinear, zeros, align_corners=False)
# with compile-time-constant thetas -> static gather indices/weights.
# TODO(synk): data-dependent bilinear gather has no clean Pallas/TPU lowering;
# kept as a plain-JAX (XLA) gather with constant numpy indices, 4 gathers total.
# ---------------------------------------------------------------------------
def _make_rotation_tables(thetas, Hs, Ws):
    t = thetas.astype(np.float64)
    xs = (2.0 * np.arange(Ws, dtype=np.float64) + 1.0) / Ws - 1.0
    ys = (2.0 * np.arange(Hs, dtype=np.float64) + 1.0) / Hs - 1.0
    bx = xs[None, None, :]
    by = ys[None, :, None]
    gx = t[:, 0, 0, None, None] * bx + t[:, 0, 1, None, None] * by + t[:, 0, 2, None, None]
    gy = t[:, 1, 0, None, None] * bx + t[:, 1, 1, None, None] * by + t[:, 1, 2, None, None]
    ix = ((gx + 1.0) * Ws - 1.0) / 2.0
    iy = ((gy + 1.0) * Hs - 1.0) / 2.0
    ix0 = np.floor(ix)
    iy0 = np.floor(iy)
    wx1 = ix - ix0
    wy1 = iy - iy0
    tables = []
    for dy, dx in ((0, 0), (0, 1), (1, 0), (1, 1)):
        cx = ix0 + dx
        cy = iy0 + dy
        w = (wy1 if dy else 1.0 - wy1) * (wx1 if dx else 1.0 - wx1)
        valid = (cx >= 0) & (cx <= Ws - 1) & (cy >= 0) & (cy <= Hs - 1)
        xi = np.clip(cx, 0, Ws - 1).astype(np.int32)
        yi = np.clip(cy, 0, Hs - 1).astype(np.int32)
        tables.append((yi, xi, np.where(valid, w, 0.0).astype(np.float32)))
    return tables


def rotate_all(image, thetas):
    """image: (C, H, W); thetas: (R, 2, 3) numpy constants -> (R, C, H, W)."""
    C, Hs, Ws = image.shape
    out = None
    for yi, xi, w in _make_rotation_tables(np.asarray(thetas), Hs, Ws):
        vals = image[:, yi, xi] * jnp.asarray(w)[None]       # (C, R, H, W)
        out = vals if out is None else out + vals
    return jnp.transpose(out, (1, 0, 2, 3))


# ---------------------------------------------------------------------------
# AdvPatch module (JAX / Pallas version)
# ---------------------------------------------------------------------------
class Config:
    width = 32
    height = 32


class AdvPatchPallas:
    def __init__(self, config, width, height):
        self.config = config
        self.model_width = width
        self.model_height = height
        self.min_contrast = 0.8
        self.max_contrast = 1.2
        self.min_brightness = -0.1
        self.max_brightness = 0.1
        self.noise_factor = 0.1

    # ---- contour generators (parameter-free numpy setup) ----
    def logo_h(self, width, height):
        Hm = np.zeros((width, height), dtype=np.float32)
        x1, x2 = int(width * 0.4), int(width * 0.6)
        y1, y2 = int(height * 0.4), int(height * 0.6)
        Hm[:x1, :] = 1.0
        Hm[x2:, :] = 1.0
        Hm[:, y1:y2] = 1.0
        return Hm.T

    def logo_G(self, length):
        G = np.zeros((length, length), dtype=np.float32)
        radius = (length - 1) / 2
        for i in range(length):
            for j in range(length):
                d = ((i - radius) ** 2 + (j - radius) ** 2) ** 0.5
                if radius * 0.6 < d < radius:
                    G[i][j] = 1
                if (j - radius) != 0 and 0 < math.atan((i - radius) / (j - radius)) < math.pi / 4 \
                        and i > int(radius):
                    G[i][j] = 0
                if int(radius * 0.8) < i < int(radius * 1.2) and int(radius) < j:
                    G[i][j] = 1
                if d >= radius:
                    G[i][j] = 0
        return G[::-1].copy()

    # ---- forward ----
    def forward(self, universal_logo, contour_ref, target_image, bk_image, key):
        C, H, W = universal_logo.shape
        k_c, k_b, k_n = jax.random.split(key, 3)
        contrast = jax.random.uniform(k_c, (), minval=self.min_contrast,
                                      maxval=self.max_contrast)
        brightness = jax.random.uniform(k_b, (), minval=self.min_brightness,
                                        maxval=self.max_brightness)
        noise = jax.random.uniform(k_n, (C, H, W), minval=-1.0,
                                   maxval=1.0) * self.noise_factor

        if contour_ref == 'G':
            contour_np = self.logo_G(self.config.width)
            scale = 0.45
        elif contour_ref == 'H':
            contour_np = self.logo_h(self.config.width, self.config.height)
            scale = 0.35

        lh, lw = int(H * scale), int(W * scale)
        th, tw = target_image.shape[2:]
        h_pos, w_pos = int((th - lh) / 2), int((tw - lw) / 2)

        # fused: median3x3 -> transform -> contour mask -> resize -> paste
        merge = fused_logo_pipeline(universal_logo, noise, contour_np,
                                    contrast, brightness, target_image[0],
                                    lh, lw, h_pos, w_pos)        # (C, th, tw)

        # fused: 4 sequential pastes of rotated copies + final resize
        return self.augment(merge, bk_image)

    def augment(self, img, bk_image, number=4):
        C, ih, iw = img.shape
        Nb, _, bh, bw = bk_image.shape
        rots = np.linspace(-20.0, 20.0, number)
        poses = np.linspace(float(self.model_width), 0.0, number + 2)[2:]

        # Reference loops over size=[1.0]; F.interpolate at the identical size
        # (align_corners=False) is the identity -> hoisted out / elided.
        angles = rots * math.pi / 180.0
        thetas = np.stack([np.array([[math.cos(a), math.sin(-a), 0.0],
                                     [math.sin(a), math.cos(a), 0.0]],
                                    dtype=np.float32) for a in angles])
        rotated = rotate_all(img, thetas)                 # (number, C, ih, iw)

        # zero-pad each rotated copy into the background frame (PyTorch paste
        # geometry: top pad = bh-ih for h_pos=0, left pad = int(pos)).
        row_off = bh - ih
        padded = jnp.stack([
            jnp.pad(rotated[r], ((0, 0),
                                 (row_off, bh - ih - row_off),
                                 (int(p), bw - iw - int(p))))
            for r, p in enumerate(poses)])                # (number, C, bh, bw)

        # size list has a single element -> concat is the single result
        return fused_augment_resize(bk_image, padded,
                                    self.model_height, self.model_width)


# ---------------------------------------------------------------------------
# float64 numpy references (for correctness checks only)
# ---------------------------------------------------------------------------
def _np_resize(x, oh, ow):
    H, W = x.shape[-2:]
    wr = _interp_matrix(oh, H).astype(np.float64)
    wc = _interp_matrix(ow, W).astype(np.float64)
    return np.einsum('oh,...hw,pw->...op', wr, x, wc)


def _np_logo_reference(logo, noise, contour, contrast, brightness, target,
                       lh, lw, h_pos, w_pos):
    C, H, W = logo.shape
    xp = np.pad(logo, ((0, 0), (1, 1), (1, 1)), mode='reflect')
    taps = np.stack([xp[:, dy:dy + H, dx:dx + W]
                     for dy in range(3) for dx in range(3)], axis=-1)
    med = np.median(taps, axis=-1)
    u = np.clip(med * contrast + brightness + noise, 1e-07, 0.9999999)
    u = np.where(contour[None].astype(np.float64) == 0.0, 0.0, u)
    lp = _np_resize(u, lh, lw)
    th, tw = target.shape[1:]
    h_bottom, w_left = h_pos, w_pos
    h_top = (th - lh) - h_bottom
    w_right = (tw - lw) - w_left
    lp_pad = np.pad(lp, ((0, 0), (h_top, h_bottom), (w_left, w_right)))
    return np.where(lp_pad == 0.0, target, lp_pad)


def _np_augment_reference(bk, padded_rot, mh, mw):
    bg = bk.copy()
    for r in range(padded_rot.shape[0]):
        img = np.broadcast_to(padded_rot[r][None], bg.shape)
        bg = np.where(img == 0.0, bg, img)
    return _np_resize(bg, mh, mw)


# ---------------------------------------------------------------------------
if __name__ == "__main__":
    config = Config()
    model = AdvPatchPallas(config, width=32, height=32)

    key = jax.random.PRNGKey(0)
    k1, k2, k3, k4, k_fwd = jax.random.split(key, 5)
    universal_logo = jax.random.uniform(k1, (3, 32, 32), dtype=jnp.float32)
    target_image = jax.random.uniform(k2, (1, 3, 48, 48), dtype=jnp.float32)
    bk_image = jax.random.uniform(k3, (1, 3, 48, 72), dtype=jnp.float32)

    # ---- check 1: fused logo-pipeline kernel vs float64 numpy reference ----
    contour_np = model.logo_h(config.width, config.height)
    noise = (jax.random.uniform(k4, (3, 32, 32), minval=-1.0, maxval=1.0)
             * 0.1).astype(jnp.float32)
    lh = lw = int(32 * 0.35)
    h_pos = w_pos = int((48 - lh) / 2)
    merge = jax.block_until_ready(
        fused_logo_pipeline(universal_logo, noise, contour_np,
                            np.float32(1.07), np.float32(0.03),
                            target_image[0], lh, lw, h_pos, w_pos))
    ref_merge = _np_logo_reference(np.asarray(universal_logo, np.float64),
                                   np.asarray(noise, np.float64), contour_np,
                                   1.07, 0.03,
                                   np.asarray(target_image[0], np.float64),
                                   lh, lw, h_pos, w_pos)
    assert np.allclose(np.asarray(merge), ref_merge, atol=5e-2), \
        "fused logo-pipeline kernel mismatch"

    # ---- check 2: fused augment+resize kernel vs numpy reference ----
    k5, k6 = jax.random.split(k4)
    fake = jax.random.uniform(k5, (4, 3, 48, 72), dtype=jnp.float32)
    fake = jnp.where(jax.random.uniform(k6, (4, 3, 48, 72)) < 0.3, 0.0, fake)
    out_b = jax.block_until_ready(
        fused_augment_resize(bk_image, fake, 32, 32))
    ref_b = _np_augment_reference(np.asarray(bk_image, np.float64),
                                  np.asarray(fake, np.float64), 32, 32)
    assert np.allclose(np.asarray(out_b), ref_b, atol=5e-2), \
        "fused augment/resize kernel mismatch"

    # ---- end-to-end forward ----
    out = jax.block_until_ready(
        model.forward(universal_logo, 'H', target_image, bk_image, k_fwd))
    assert out.shape == (1, 3, 32, 32), out.shape
    assert bool(jnp.all(jnp.isfinite(out)))
    print("KERNEL_OK")
</pallas_src>

<mosaic_0001>
module attributes {stable_mosaic.version = 11 : i64} {
  func.func @kernel(%arg0: memref<2xf32, #tpu.memory_space<smem>>, %arg1: memref<3x34x34xf32, #tpu.memory_space<vmem>>, %arg2: memref<3x32x32xf32, #tpu.memory_space<vmem>>, %arg3: memref<32x32xf32, #tpu.memory_space<vmem>>, %arg4: memref<48x32xf32, #tpu.memory_space<vmem>>, %arg5: memref<32x48xf32, #tpu.memory_space<vmem>>, %arg6: memref<3x48x48xf32, #tpu.memory_space<vmem>>, %arg7: memref<3x48x48xf32, #tpu.memory_space<vmem>>) attributes {dimension_semantics = [], scalar_prefetch = 0 : i64, scratch_operands = 0 : i64, tpu.core_type = #tpu.core_type<tc>} {
    %c0 = arith.constant 0 : index
    %0 = memref.load %arg0[%c0] : memref<2xf32, #tpu.memory_space<smem>>
    %c1 = arith.constant 1 : index
    %1 = memref.load %arg0[%c1] : memref<2xf32, #tpu.memory_space<smem>>
    %c0_0 = arith.constant 0 : index
    %c0_1 = arith.constant 0 : index
    %2 = vector.load %arg3[%c0_0, %c0_1] : memref<32x32xf32, #tpu.memory_space<vmem>>, vector<32x32xf32>
    %c0_2 = arith.constant 0 : index
    %c0_3 = arith.constant 0 : index
    %c0_4 = arith.constant 0 : index
    %3 = vector.load %arg1[%c0_2, %c0_3, %c0_4] : memref<3x34x34xf32, #tpu.memory_space<vmem>>, vector<1x34x34xf32>
    %4 = vector.shape_cast %3 : vector<1x34x34xf32> to vector<34x34xf32>
    %5 = vector.extract_strided_slice %4 {offsets = [0, 0], sizes = [32, 32], strides = [1, 1]} : vector<34x34xf32> to vector<32x32xf32>
    %6 = vector.extract_strided_slice %4 {offsets = [0, 1], sizes = [32, 32], strides = [1, 1]} : vector<34x34xf32> to vector<32x32xf32>
    %7 = vector.extract_strided_slice %4 {offsets = [0, 2], sizes = [32, 32], strides = [1, 1]} : vector<34x34xf32> to vector<32x32xf32>
    %8 = vector.extract_strided_slice %4 {offsets = [1, 0], sizes = [32, 32], strides = [1, 1]} : vector<34x34xf32> to vector<32x32xf32>
    %9 = vector.extract_strided_slice %4 {offsets = [1, 1], sizes = [32, 32], strides = [1, 1]} : vector<34x34xf32> to vector<32x32xf32>
    %10 = vector.extract_strided_slice %4 {offsets = [1, 2], sizes = [32, 32], strides = [1, 1]} : vector<34x34xf32> to vector<32x32xf32>
    %11 = vector.extract_strided_slice %4 {offsets = [2, 0], sizes = [32, 32], strides = [1, 1]} : vector<34x34xf32> to vector<32x32xf32>
    %12 = vector.extract_strided_slice %4 {offsets = [2, 1], sizes = [32, 32], strides = [1, 1]} : vector<34x34xf32> to vector<32x32xf32>
    %13 = vector.extract_strided_slice %4 {offsets = [2, 2], sizes = [32, 32], strides = [1, 1]} : vector<34x34xf32> to vector<32x32xf32>
    %14 = arith.minimumf %6, %7 : vector<32x32xf32>
    %15 = arith.maximumf %6, %7 : vector<32x32xf32>
    %16 = arith.minimumf %9, %10 : vector<32x32xf32>
    %17 = arith.maximumf %9, %10 : vector<32x32xf32>
    %18 = arith.minimumf %12, %13 : vector<32x32xf32>
    %19 = arith.maximumf %12, %13 : vector<32x32xf32>
    %20 = arith.minimumf %5, %14 : vector<32x32xf32>
    %21 = arith.maximumf %5, %14 : vector<32x32xf32>
    %22 = arith.minimumf %8, %16 : vector<32x32xf32>
    %23 = arith.maximumf %8, %16 : vector<32x32xf32>
    %24 = arith.minimumf %11, %18 : vector<32x32xf32>
    %25 = arith.maximumf %11, %18 : vector<32x32xf32>
    %26 = arith.minimumf %21, %15 : vector<32x32xf32>
    %27 = arith.maximumf %21, %15 : vector<32x32xf32>
    %28 = arith.minimumf %23, %17 : vector<32x32xf32>
    %29 = arith.maximumf %23, %17 : vector<32x32xf32>
    %30 = arith.minimumf %25, %19 : vector<32x32xf32>
    %31 = arith.maximumf %25, %19 : vector<32x32xf32>
    %32 = arith.maximumf %20, %22 : vector<32x32xf32>
    %33 = arith.minimumf %29, %31 : vector<32x32xf32>
    %34 = arith.minimumf %28, %30 : vector<32x32xf32>
    %35 = arith.maximumf %28, %30 : vector<32x32xf32>
    %36 = arith.maximumf %32, %24 : vector<32x32xf32>
    %37 = arith.maximumf %26, %34 : vector<32x32xf32>
    %38 = arith.minimumf %27, %33 : vector<32x32xf32>
    %39 = arith.minimumf %37, %35 : vector<32x32xf32>
    %40 = arith.minimumf %39, %38 : vector<32x32xf32>
    %41 = arith.maximumf %39, %38 : vector<32x32xf32>
    %42 = arith.maximumf %36, %40 : vector<32x32xf32>
    %43 = arith.minimumf %42, %41 : vector<32x32xf32>
    %44 = vector.broadcast %0 : f32 to vector<32x32xf32>
    %45 = arith.mulf %43, %44 : vector<32x32xf32>
    %46 = vector.broadcast %1 : f32 to vector<32x32xf32>
    %47 = arith.addf %45, %46 : vector<32x32xf32>
    %c0_5 = arith.constant 0 : index
    %c0_6 = arith.constant 0 : index
    %c0_7 = arith.constant 0 : index
    %48 = vector.load %arg2[%c0_5, %c0_6, %c0_7] : memref<3x32x32xf32, #tpu.memory_space<vmem>>, vector<1x32x32xf32>
    %49 = vector.shape_cast %48 : vector<1x32x32xf32> to vector<32x32xf32>
    %50 = arith.addf %47, %49 : vector<32x32xf32>
    %cst = arith.constant 1.000000e-07 : f32
    %cst_8 = arith.constant 0.99999988 : f32
    %51 = vector.broadcast %cst : f32 to vector<32x32xf32>
    %52 = arith.maximumf %51, %50 : vector<32x32xf32>
    %53 = vector.broadcast %cst_8 : f32 to vector<32x32xf32>
    %54 = arith.minimumf %53, %52 : vector<32x32xf32>
    %cst_9 = arith.constant 0.000000e+00 : f32
    %55 = vector.broadcast %cst_9 : f32 to vector<32x32xf32>
    %56 = arith.cmpf oeq, %2, %55 : vector<32x32xf32>
    %cst_10 = arith.constant 0.000000e+00 : f32
    %57 = vector.broadcast %cst_10 : f32 to vector<32x32xf32>
    %58 = arith.select %56, %57, %54 : vector<32x32xi1>, vector<32x32xf32>
    %c1_11 = arith.constant 1 : index
    %c0_12 = arith.constant 0 : index
    %c0_13 = arith.constant 0 : index
    %59 = vector.load %arg1[%c1_11, %c0_12, %c0_13] : memref<3x34x34xf32, #tpu.memory_space<vmem>>, vector<1x34x34xf32>
    %60 = vector.shape_cast %59 : vector<1x34x34xf32> to vector<34x34xf32>
    %61 = vector.extract_strided_slice %60 {offsets = [0, 0], sizes = [32, 32], strides = [1, 1]} : vector<34x34xf32> to vector<32x32xf32>
    %62 = vector.extract_strided_slice %60 {offsets = [0, 1], sizes = [32, 32], strides = [1, 1]} : vector<34x34xf32> to vector<32x32xf32>
    %63 = vector.extract_strided_slice %60 {offsets = [0, 2], sizes = [32, 32], strides = [1, 1]} : vector<34x34xf32> to vector<32x32xf32>
    %64 = vector.extract_strided_slice %60 {offsets = [1, 0], sizes = [32, 32], strides = [1, 1]} : vector<34x34xf32> to vector<32x32xf32>
    %65 = vector.extract_strided_slice %60 {offsets = [1, 1], sizes = [32, 32], strides = [1, 1]} : vector<34x34xf32> to vector<32x32xf32>
    %66 = vector.extract_strided_slice %60 {offsets = [1, 2], sizes = [32, 32], strides = [1, 1]} : vector<34x34xf32> to vector<32x32xf32>
    %67 = vector.extract_strided_slice %60 {offsets = [2, 0], sizes = [32, 32], strides = [1, 1]} : vector<34x34xf32> to vector<32x32xf32>
    %68 = vector.extract_strided_slice %60 {offsets = [2, 1], sizes = [32, 32], strides = [1, 1]} : vector<34x34xf32> to vector<32x32xf32>
    %69 = vector.extract_strided_slice %60 {offsets = [2, 2], sizes = [32, 32], strides = [1, 1]} : vector<34x34xf32> to vector<32x32xf32>
    %70 = arith.minimumf %62, %63 : vector<32x32xf32>
    %71 = arith.maximumf %62, %63 : vector<32x32xf32>
    %72 = arith.minimumf %65, %66 : vector<32x32xf32>
    %73 = arith.maximumf %65, %66 : vector<32x32xf32>
    %74 = arith.minimumf %68, %69 : vector<32x32xf32>
    %75 = arith.maximumf %68, %69 : vector<32x32xf32>
    %76 = arith.minimumf %61, %70 : vector<32x32xf32>
    %77 = arith.maximumf %61, %70 : vector<32x32xf32>
    %78 = arith.minimumf %64, %72 : vector<32x32xf32>
    %79 = arith.maximumf %64, %72 : vector<32x32xf32>
    %80 = arith.minimumf %67, %74 : vector<32x32xf32>
    %81 = arith.maximumf %67, %74 : vector<32x32xf32>
    %82 = arith.minimumf %77, %71 : vector<32x32xf32>
    %83 = arith.maximumf %77, %71 : vector<32x32xf32>
    %84 = arith.minimumf %79, %73 : vector<32x32xf32>
    %85 = arith.maximumf %79, %73 : vector<32x32xf32>
    %86 = arith.minimumf %81, %75 : vector<32x32xf32>
    %87 = arith.maximumf %81, %75 : vector<32x32xf32>
    %88 = arith.maximumf %76, %78 : vector<32x32xf32>
    %89 = arith.minimumf %85, %87 : vector<32x32xf32>
    %90 = arith.minimumf %84, %86 : vector<32x32xf32>
    %91 = arith.maximumf %84, %86 : vector<32x32xf32>
    %92 = arith.maximumf %88, %80 : vector<32x32xf32>
    %93 = arith.maximumf %82, %90 : vector<32x32xf32>
    %94 = arith.minimumf %83, %89 : vector<32x32xf32>
    %95 = arith.minimumf %93, %91 : vector<32x32xf32>
    %96 = arith.minimumf %95, %94 : vector<32x32xf32>
    %97 = arith.maximumf %95, %94 : vector<32x32xf32>
    %98 = arith.maximumf %92, %96 : vector<32x32xf32>
    %99 = arith.minimumf %98, %97 : vector<32x32xf32>
    %100 = vector.broadcast %0 : f32 to vector<32x32xf32>
    %101 = arith.mulf %99, %100 : vector<32x32xf32>
    %102 = vector.broadcast %1 : f32 to vector<32x32xf32>
    %103 = arith.addf %101, %102 : vector<32x32xf32>
    %c1_14 = arith.constant 1 : index
    %c0_15 = arith.constant 0 : index
    %c0_16 = arith.constant 0 : index
    %104 = vector.load %arg2[%c1_14, %c0_15, %c0_16] : memref<3x32x32xf32, #tpu.memory_space<vmem>>, vector<1x32x32xf32>
    %105 = vector.shape_cast %104 : vector<1x32x32xf32> to vector<32x32xf32>
    %106 = arith.addf %103, %105 : vector<32x32xf32>
    %cst_17 = arith.constant 1.000000e-07 : f32
    %cst_18 = arith.constant 0.99999988 : f32
    %107 = vector.broadcast %cst_17 : f32 to vector<32x32xf32>
    %108 = arith.maximumf %107, %106 : vector<32x32xf32>
    %109 = vector.broadcast %cst_18 : f32 to vector<32x32xf32>
    %110 = arith.minimumf %109, %108 : vector<32x32xf32>
    %cst_19 = arith.constant 0.000000e+00 : f32
    %111 = vector.broadcast %cst_19 : f32 to vector<32x32xf32>
    %112 = arith.cmpf oeq, %2, %111 : vector<32x32xf32>
    %cst_20 = arith.constant 0.000000e+00 : f32
    %113 = vector.broadcast %cst_20 : f32 to vector<32x32xf32>
    %114 = arith.select %112, %113, %110 : vector<32x32xi1>, vector<32x32xf32>
    %c2 = arith.constant 2 : index
    %c0_21 = arith.constant 0 : index
    %c0_22 = arith.constant 0 : index
    %115 = vector.load %arg1[%c2, %c0_21, %c0_22] : memref<3x34x34xf32, #tpu.memory_space<vmem>>, vector<1x34x34xf32>
    %116 = vector.shape_cast %115 : vector<1x34x34xf32> to vector<34x34xf32>
    %117 = vector.extract_strided_slice %116 {offsets = [0, 0], sizes = [32, 32], strides = [1, 1]} : vector<34x34xf32> to vector<32x32xf32>
    %118 = vector.extract_strided_slice %116 {offsets = [0, 1], sizes = [32, 32], strides = [1, 1]} : vector<34x34xf32> to vector<32x32xf32>
    %119 = vector.extract_strided_slice %116 {offsets = [0, 2], sizes = [32, 32], strides = [1, 1]} : vector<34x34xf32> to vector<32x32xf32>
    %120 = vector.extract_strided_slice %116 {offsets = [1, 0], sizes = [32, 32], strides = [1, 1]} : vector<34x34xf32> to vector<32x32xf32>
    %121 = vector.extract_strided_slice %116 {offsets = [1, 1], sizes = [32, 32], strides = [1, 1]} : vector<34x34xf32> to vector<32x32xf32>
    %122 = vector.extract_strided_slice %116 {offsets = [1, 2], sizes = [32, 32], strides = [1, 1]} : vector<34x34xf32> to vector<32x32xf32>
    %123 = vector.extract_strided_slice %116 {offsets = [2, 0], sizes = [32, 32], strides = [1, 1]} : vector<34x34xf32> to vector<32x32xf32>
    %124 = vector.extract_strided_slice %116 {offsets = [2, 1], sizes = [32, 32], strides = [1, 1]} : vector<34x34xf32> to vector<32x32xf32>
    %125 = vector.extract_strided_slice %116 {offsets = [2, 2], sizes = [32, 32], strides = [1, 1]} : vector<34x34xf32> to vector<32x32xf32>
    %126 = arith.minimumf %118, %119 : vector<32x32xf32>
    %127 = arith.maximumf %118, %119 : vector<32x32xf32>
    %128 = arith.minimumf %121, %122 : vector<32x32xf32>
    %129 = arith.maximumf %121, %122 : vector<32x32xf32>
    %130 = arith.minimumf %124, %125 : vector<32x32xf32>
    %131 = arith.maximumf %124, %125 : vector<32x32xf32>
    %132 = arith.minimumf %117, %126 : vector<32x32xf32>
    %133 = arith.maximumf %117, %126 : vector<32x32xf32>
    %134 = arith.minimumf %120, %128 : vector<32x32xf32>
    %135 = arith.maximumf %120, %128 : vector<32x32xf32>
    %136 = arith.minimumf %123, %130 : vector<32x32xf32>
    %137 = arith.maximumf %123, %130 : vector<32x32xf32>
    %138 = arith.minimumf %133, %127 : vector<32x32xf32>
    %139 = arith.maximumf %133, %127 : vector<32x32xf32>
    %140 = arith.minimumf %135, %129 : vector<32x32xf32>
    %141 = arith.maximumf %135, %129 : vector<32x32xf32>
    %142 = arith.minimumf %137, %131 : vector<32x32xf32>
    %143 = arith.maximumf %137, %131 : vector<32x32xf32>
    %144 = arith.maximumf %132, %134 : vector<32x32xf32>
    %145 = arith.minimumf %141, %143 : vector<32x32xf32>
    %146 = arith.minimumf %140, %142 : vector<32x32xf32>
    %147 = arith.maximumf %140, %142 : vector<32x32xf32>
    %148 = arith.maximumf %144, %136 : vector<32x32xf32>
    %149 = arith.maximumf %138, %146 : vector<32x32xf32>
    %150 = arith.minimumf %139, %145 : vector<32x32xf32>
    %151 = arith.minimumf %149, %147 : vector<32x32xf32>
    %152 = arith.minimumf %151, %150 : vector<32x32xf32>
    %153 = arith.maximumf %151, %150 : vector<32x32xf32>
    %154 = arith.maximumf %148, %152 : vector<32x32xf32>
    %155 = arith.minimumf %154, %153 : vector<32x32xf32>
    %156 = vector.broadcast %0 : f32 to vector<32x32xf32>
    %157 = arith.mulf %155, %156 : vector<32x32xf32>
    %158 = vector.broadcast %1 : f32 to vector<32x32xf32>
    %159 = arith.addf %157, %158 : vector<32x32xf32>
    %c2_23 = arith.constant 2 : index
    %c0_24 = arith.constant 0 : index
    %c0_25 = arith.constant 0 : index
    %160 = vector.load %arg2[%c2_23, %c0_24, %c0_25] : memref<3x32x32xf32, #tpu.memory_space<vmem>>, vector<1x32x32xf32>
    %161 = vector.shape_cast %160 : vector<1x32x32xf32> to vector<32x32xf32>
    %162 = arith.addf %159, %161 : vector<32x32xf32>
    %cst_26 = arith.constant 1.000000e-07 : f32
    %cst_27 = arith.constant 0.99999988 : f32
    %163 = vector.broadcast %cst_26 : f32 to vector<32x32xf32>
    %164 = arith.maximumf %163, %162 : vector<32x32xf32>
    %165 = vector.broadcast %cst_27 : f32 to vector<32x32xf32>
    %166 = arith.minimumf %165, %164 : vector<32x32xf32>
    %cst_28 = arith.constant 0.000000e+00 : f32
    %167 = vector.broadcast %cst_28 : f32 to vector<32x32xf32>
    %168 = arith.cmpf oeq, %2, %167 : vector<32x32xf32>
    %cst_29 = arith.constant 0.000000e+00 : f32
    %169 = vector.broadcast %cst_29 : f32 to vector<32x32xf32>
    %170 = arith.select %168, %169, %166 : vector<32x32xi1>, vector<32x32xf32>
    %171 = tpu.concatenate %58, %114, %170 in 0 : vector<32x32xf32>, vector<32x32xf32>, vector<32x32xf32> -> vector<96x32xf32>
    %c0_30 = arith.constant 0 : index
    %c0_31 = arith.constant 0 : index
    %172 = vector.load %arg5[%c0_30, %c0_31] : memref<32x48xf32, #tpu.memory_space<vmem>>, vector<32x48xf32>
    %cst_32 = arith.constant dense<0.000000e+00> : vector<96x48xf32>
    %173 = tpu.matmul %171, %172, %cst_32 {dimension_numbers = #tpu.dot_dimension_numbers<[1], [0], [0], [1], [0, 0, 1, 1], [], []>} : vector<96x32xf32>, vector<32x48xf32>, vector<96x48xf32> -> vector<96x48xf32>
    %c0_33 = arith.constant 0 : index
    %c0_34 = arith.constant 0 : index
    %174 = vector.load %arg4[%c0_33, %c0_34] : memref<48x32xf32, #tpu.memory_space<vmem>>, vector<48x32xf32>
    %175 = vector.extract_strided_slice %173 {offsets = [0, 0], sizes = [32, 48], strides = [1, 1]} : vector<96x48xf32> to vector<32x48xf32>
    %cst_35 = arith.constant dense<0.000000e+00> : vector<48x48xf32>
    %176 = tpu.matmul %174, %175, %cst_35 {dimension_numbers = #tpu.dot_dimension_numbers<[1], [0], [0], [1], [0, 0, 1, 1], [], []>} : vector<48x32xf32>, vector<32x48xf32>, vector<48x48xf32> -> vector<48x48xf32>
    %cst_36 = arith.constant 0.000000e+00 : f32
    %177 = vector.broadcast %cst_36 : f32 to vector<48x48xf32>
    %178 = arith.cmpf oeq, %176, %177 : vector<48x48xf32>
    %c0_37 = arith.constant 0 : index
    %c0_38 = arith.constant 0 : index
    %c0_39 = arith.constant 0 : index
    %179 = vector.load %arg6[%c0_37, %c0_38, %c0_39] : memref<3x48x48xf32, #tpu.memory_space<vmem>>, vector<1x48x48xf32>
    %180 = vector.shape_cast %179 : vector<1x48x48xf32> to vector<48x48xf32>
    %181 = arith.select %178, %180, %176 : vector<48x48xi1>, vector<48x48xf32>
    %c0_40 = arith.constant 0 : index
    %c0_41 = arith.constant 0 : index
    %c0_42 = arith.constant 0 : index
    %182 = vector.load %arg7[%c0_40, %c0_41, %c0_42] : memref<3x48x48xf32, #tpu.memory_space<vmem>>, vector<1x48x48xf32>
    %183 = vector.shape_cast %182 : vector<1x48x48xf32> to vector<48x48xf32>
    %184 = vector.shape_cast %181 : vector<48x48xf32> to vector<1x48x48xf32>
    tpu.vector_store %arg7[%c0_40, %c0_41, %c0_42], %184 {strides = array<i32>} : memref<3x48x48xf32, #tpu.memory_space<vmem>>, vector<1x48x48xf32>,
    %185 = vector.extract_strided_slice %173 {offsets = [32, 0], sizes = [32, 48], strides = [1, 1]} : vector<96x48xf32> to vector<32x48xf32>
    %cst_43 = arith.constant dense<0.000000e+00> : vector<48x48xf32>
    %186 = tpu.matmul %174, %185, %cst_43 {dimension_numbers = #tpu.dot_dimension_numbers<[1], [0], [0], [1], [0, 0, 1, 1], [], []>} : vector<48x32xf32>, vector<32x48xf32>, vector<48x48xf32> -> vector<48x48xf32>
    %cst_44 = arith.constant 0.000000e+00 : f32
    %187 = vector.broadcast %cst_44 : f32 to vector<48x48xf32>
    %188 = arith.cmpf oeq, %186, %187 : vector<48x48xf32>
    %c1_45 = arith.constant 1 : index
    %c0_46 = arith.constant 0 : index
    %c0_47 = arith.constant 0 : index
    %189 = vector.load %arg6[%c1_45, %c0_46, %c0_47] : memref<3x48x48xf32, #tpu.memory_space<vmem>>, vector<1x48x48xf32>
    %190 = vector.shape_cast %189 : vector<1x48x48xf32> to vector<48x48xf32>
    %191 = arith.select %188, %190, %186 : vector<48x48xi1>, vector<48x48xf32>
    %c1_48 = arith.constant 1 : index
    %c0_49 = arith.constant 0 : index
    %c0_50 = arith.constant 0 : index
    %192 = vector.load %arg7[%c1_48, %c0_49, %c0_50] : memref<3x48x48xf32, #tpu.memory_space<vmem>>, vector<1x48x48xf32>
    %193 = vector.shape_cast %192 : vector<1x48x48xf32> to vector<48x48xf32>
    %194 = vector.shape_cast %191 : vector<48x48xf32> to vector<1x48x48xf32>
    tpu.vector_store %arg7[%c1_48, %c0_49, %c0_50], %194 {strides = array<i32>} : memref<3x48x48xf32, #tpu.memory_space<vmem>>, vector<1x48x48xf32>,
    %195 = vector.extract_strided_slice %173 {offsets = [64, 0], sizes = [32, 48], strides = [1, 1]} : vector<96x48xf32> to vector<32x48xf32>
    %cst_51 = arith.constant dense<0.000000e+00> : vector<48x48xf32>
    %196 = tpu.matmul %174, %195, %cst_51 {dimension_numbers = #tpu.dot_dimension_numbers<[1], [0], [0], [1], [0, 0, 1, 1], [], []>} : vector<48x32xf32>, vector<32x48xf32>, vector<48x48xf32> -> vector<48x48xf32>
    %cst_52 = arith.constant 0.000000e+00 : f32
    %197 = vector.broadcast %cst_52 : f32 to vector<48x48xf32>
    %198 = arith.cmpf oeq, %196, %197 : vector<48x48xf32>
    %c2_53 = arith.constant 2 : index
    %c0_54 = arith.constant 0 : index
    %c0_55 = arith.constant 0 : index
    %199 = vector.load %arg6[%c2_53, %c0_54, %c0_55] : memref<3x48x48xf32, #tpu.memory_space<vmem>>, vector<1x48x48xf32>
    %200 = vector.shape_cast %199 : vector<1x48x48xf32> to vector<48x48xf32>
    %201 = arith.select %198, %200, %196 : vector<48x48xi1>, vector<48x48xf32>
    %c2_56 = arith.constant 2 : index
    %c0_57 = arith.constant 0 : index
    %c0_58 = arith.constant 0 : index
    %202 = vector.load %arg7[%c2_56, %c0_57, %c0_58] : memref<3x48x48xf32, #tpu.memory_space<vmem>>, vector<1x48x48xf32>
    %203 = vector.shape_cast %202 : vector<1x48x48xf32> to vector<48x48xf32>
    %204 = vector.shape_cast %201 : vector<48x48xf32> to vector<1x48x48xf32>
    tpu.vector_store %arg7[%c2_56, %c0_57, %c0_58], %204 {strides = array<i32>} : memref<3x48x48xf32, #tpu.memory_space<vmem>>, vector<1x48x48xf32>,
    return
  }
}

</mosaic_0001>

<llo_original>
// kernel: tpu_custom_call.1
$region0: #{tpu_custom_call.1}
  #allocation0 [shape = 'u32[]', space=smem, size = 0x4, offset = 0x4, fixed_abs, tag = 'smem constant byte address 0x4 - core index']
  #allocation1 [shape = 'u32[144,128]{1,0:T(1,128)}', space=vmem, size = 0x12000, scoped, tag = 'internal scratch']
  %s0 = inlined_call_operand.vmem [shape: f32[2], index: 0, kind: input, shape index: {}]
  %s1 = inlined_call_operand.hbm [shape: f32[3,34,34], index: 1, kind: input, shape index: {}]
  %s2 = inlined_call_operand.hbm [shape: f32[3,32,32], index: 2, kind: input, shape index: {}]
  %s3 = inlined_call_operand.vmem [shape: f32[32,32], index: 3, kind: input, shape index: {}]
  %s4 = inlined_call_operand.vmem [shape: f32[48,32], index: 4, kind: input, shape index: {}]
  %s5 = inlined_call_operand.vmem [shape: f32[32,48], index: 5, kind: input, shape index: {}]
  %s6 = inlined_call_operand.hbm [shape: f32[3,48,48], index: 6, kind: input, shape index: {}]
  %s7 = inlined_call_operand.hbm [shape: f32[3,48,48], index: 7, kind: output, shape index: {}]
  %s8 = sld [smem:[#allocation0]]
  $region54: #{tpu_custom_call.1} parent=0
    _
  %s10 = ssub.s32 1, %s8
  %s11 = scalar_select 0, %s10, %s8
  $region1: #{tpu_custom_call.1} parent=0
    #allocation2 [shape = 'u8[512]{0}', space=smem, size = 0x200, scoped, tag = 'input window, operand 0, single buffered']
    #allocation3 [shape = 's32[1]{0}', space=sflag, size = 0x4, scoped, tag = 'scoped memory for tpu_custom_call.1']
    #allocation4 [shape = 's32[1]{0}', space=sflag, size = 0x4, scoped, tag = 'scoped memory for tpu_custom_call.1']
    #allocation5 [shape = 's32[1]{0}', space=sflag, size = 0x4, scoped, tag = 'scoped memory for tpu_custom_call.1']
    #allocation6 [shape = 'u8[61440]{0}', space=vmem, size = 0xf000, scoped, tag = 'input window, operand 1, single buffered']
    #allocation7 [shape = 'u8[49152]{0}', space=vmem, size = 0xc000, scoped, tag = 'input window, operand 2, single buffered']
    #allocation8 [shape = 's32[1]{0}', space=sflag, size = 0x4, scoped, tag = 'scoped memory for tpu_custom_call.1']
    #allocation9 [shape = 'u8[73728]{0}', space=vmem, size = 0x12000, scoped, tag = 'input window, operand 6, single buffered']
    #allocation10 [shape = 'u8[73728]{0}', space=vmem, size = 0x12000, scoped, tag = 'output window, operand 0, single buffered']
    %12 = vsyncpa [#allocation5], 0
    %13 = vsyncpa [#allocation3], 0
    %14 = vsyncpa [#allocation8], 0
    %15 = vsyncpa [#allocation4], 0
    // Predicated region
    $region2: #{tpu_custom_call.1} parent=1 // pred_check
      _
    $region3: #{tpu_custom_call.1} parent=1 // pred_check_branch
      %17 = sbr.rel (0) target = $region5
    $region4: #{tpu_custom_call.1} parent=1 // pred_region
      %s19 = ssub.s32 16, 16
      %20 = vsyncadd [#allocation5], %s19
      %s22 = sshll.u32 %s0, 4
      %s23 = int_to_ptr.vmem [resolvable:$true] %s22
      %25 = dma.vmem_to_smem %s23, 16, [#allocation2], [#allocation5]
    $region5: #{tpu_custom_call.1} parent=1 // pred_fallthru
      _
    // Predicated region
    $region6: #{tpu_custom_call.1} parent=1 // pred_check
      _
    $region7: #{tpu_custom_call.1} parent=1 // pred_check_branch
      %27 = sbr.rel (0) target = $region9
    $region8: #{tpu_custom_call.1} parent=1 // pred_region
      %s29 = ssub.s32 1920, 1920
      %30 = vsyncadd [#allocation3], %s29
      %s31 = sshll.u32 [#allocation6], 4
      %s32 = int_to_ptr.vmem [resolvable:$true] %s31
      %37 = dma.hbm_to_vmem [thread:$0]  %s1, 1920, %s32, [#allocation3], 128, 128, 8
    $region9: #{tpu_custom_call.1} parent=1 // pred_fallthru
      _
    // Predicated region
    $region10: #{tpu_custom_call.1} parent=1 // pred_check
      _
    $region11: #{tpu_custom_call.1} parent=1 // pred_check_branch
      %39 = sbr.rel (0) target = $region13
    $region12: #{tpu_custom_call.1} parent=1 // pred_region
      %s41 = ssub.s32 1536, 1536
      %42 = vsyncadd [#allocation8], %s41
      %s43 = sshll.u32 [#allocation7], 4
      %s44 = int_to_ptr.vmem [resolvable:$true] %s43
      %49 = dma.hbm_to_vmem [thread:$0]  %s2, 1536, %s44, [#allocation8], 128, 128, 8
    $region13: #{tpu_custom_call.1} parent=1 // pred_fallthru
      _
    // Predicated region
    $region14: #{tpu_custom_call.1} parent=1 // pred_check
      _
    $region15: #{tpu_custom_call.1} parent=1 // pred_check_branch
      %51 = sbr.rel (0) target = $region17
    $region16: #{tpu_custom_call.1} parent=1 // pred_region
      _
    $region17: #{tpu_custom_call.1} parent=1 // pred_fallthru
      _
    // Predicated region
    $region18: #{tpu_custom_call.1} parent=1 // pred_check
      _
    $region19: #{tpu_custom_call.1} parent=1 // pred_check_branch
      %53 = sbr.rel (0) target = $region21
    $region20: #{tpu_custom_call.1} parent=1 // pred_region
      _
    $region21: #{tpu_custom_call.1} parent=1 // pred_fallthru
      _
    // Predicated region
    $region22: #{tpu_custom_call.1} parent=1 // pred_check
      _
    $region23: #{tpu_custom_call.1} parent=1 // pred_check_branch
      %55 = sbr.rel (0) target = $region25
    $region24: #{tpu_custom_call.1} parent=1 // pred_region
      _
    $region25: #{tpu_custom_call.1} parent=1 // pred_fallthru
      _
    // Predicated region
    $region26: #{tpu_custom_call.1} parent=1 // pred_check
      _
    $region27: #{tpu_custom_call.1} parent=1 // pred_check_branch
      %57 = sbr.rel (0) target = $region29
    $region28: #{tpu_custom_call.1} parent=1 // pred_region
      %s59 = ssub.s32 2304, 2304
      %60 = vsyncadd [#allocation8], %s59
      %s61 = sshll.u32 [#allocation9], 4
      %s62 = int_to_ptr.vmem [resolvable:$true] %s61
      %67 = dma.hbm_to_vmem [thread:$0]  %s6, 2304, %s62, [#allocation8], 128, 128, 8
    $region29: #{tpu_custom_call.1} parent=1 // pred_fallthru
      _
    // Predicated region
    $region30: #{tpu_custom_call.1} parent=1 // pred_check
      _
    $region31: #{tpu_custom_call.1} parent=1 // pred_check_branch
      %69 = sbr.rel (0) target = $region33
    $region32: #{tpu_custom_call.1} parent=1 // pred_region
      %70 = dma.done [#allocation5], 16
    $region33: #{tpu_custom_call.1} parent=1 // pred_fallthru
      _
    // Predicated region
    $region34: #{tpu_custom_call.1} parent=1 // pred_check
      _
    $region35: #{tpu_custom_call.1} parent=1 // pred_check_branch
      %72 = sbr.rel (0) target = $region37
    $region36: #{tpu_custom_call.1} parent=1 // pred_region
      %73 = dma.done [#allocation3], 1920
    $region37: #{tpu_custom_call.1} parent=1 // pred_fallthru
      _
    // Predicated region
    $region38: #{tpu_custom_call.1} parent=1 // pred_check
      _
    $region39: #{tpu_custom_call.1} parent=1 // pred_check_branch
      %75 = sbr.rel (0) target = $region41
    $region40: #{tpu_custom_call.1} parent=1 // pred_region
      %76 = dma.done [#allocation8], 1536
    $region41: #{tpu_custom_call.1} parent=1 // pred_fallthru
      _
    // Predicated region
    $region42: #{tpu_custom_call.1} parent=1 // pred_check
      _
    $region43: #{tpu_custom_call.1} parent=1 // pred_check_branch
      %78 = sbr.rel (0) target = $region45
    $region44: #{tpu_custom_call.1} parent=1 // pred_region
      %79 = dma.done [#allocation8], 2304
    $region45: #{tpu_custom_call.1} parent=1 // pred_fallthru
      _
    %80 = sfence
    %s81 = sld [smem:[#allocation2]]
    %s82 = sld [smem:[#allocation2 + $0x1]]
    %v83 = vld [vmem:[%s3] sm:$0xff]
    %v84 = vld [vmem:[%s3 + $0x8] sm:$0xff]
    %v85 = vld [vmem:[%s3 + $0x10] sm:$0xff]
    %v86 = vld [vmem:[%s3 + $0x18] sm:$0xff]
    %v87 = vld [vmem:[#allocation6] sm:$0xff]
    %v88 = vld [vmem:[#allocation6 + $0x8] sm:$0xff]
    %v89 = vld [vmem:[#allocation6 + $0x10] sm:$0xff]
    %v90 = vld [vmem:[#allocation6 + $0x18] sm:$0xff]
    %v91 = vld [vmem:[#allocation6 + $0x20] sm:$0x3]
    %96 = vrot.lane.b32.xlu0 %v87, 127
    %v97 = vpop.permute.xlu0 %96
    %98 = vrot.lane.b32.xlu0 %v88, 127
    %v99 = vpop.permute.xlu0 %98
    %100 = vrot.lane.b32.xlu0 %v89, 127
    %v101 = vpop.permute.xlu0 %100
    %102 = vrot.lane.b32.xlu0 %v90, 127
    %v103 = vpop.permute.xlu0 %102
    %v108 = vmin.f32 %v87, %v97
    %v109 = vmin.f32 %v88, %v99
    %v110 = vmin.f32 %v89, %v101
    %v111 = vmin.f32 %v90, %v103
    %v112 = vmax.f32 %v87, %v97
    %v113 = vmax.f32 %v88, %v99
    %v114 = vmax.f32 %v89, %v101
    %v115 = vmax.f32 %v90, %v103
    %117 = vrot.lane.b32.xlu0 %v91, 127
    %v118 = vpop.permute.xlu0 %117
    %v120 = vmin.f32 %v91, %v118
    %v121 = vmax.f32 %v91, %v118
    %126 = vrot.lane.b32.xlu0 %v108, 127
    %v127 = vpop.permute.xlu0 %126
    %128 = vrot.lane.b32.xlu0 %v109, 127
    %v129 = vpop.permute.xlu0 %128
    %130 = vrot.lane.b32.xlu0 %v110, 127
    %v131 = vpop.permute.xlu0 %130
    %132 = vrot.lane.b32.xlu0 %v111, 127
    %v133 = vpop.permute.xlu0 %132
    %v138 = vmin.f32 %v87, %v127
    %v139 = vmin.f32 %v88, %v129
    %v140 = vmin.f32 %v89, %v131
    %v141 = vmin.f32 %v90, %v133
    %v142 = vmax.f32 %v87, %v127
    %v143 = vmax.f32 %v88, %v129
    %v144 = vmax.f32 %v89, %v131
    %v145 = vmax.f32 %v90, %v133
    %147 = vrot.lane.b32.xlu0 %v120, 127
    %v148 = vpop.permute.xlu0 %147
    %v150 = vmin.f32 %v91, %v148
    %v151 = vmax.f32 %v91, %v148
    %156 = vrot.lane.b32.xlu0 %v112, 127
    %v157 = vpop.permute.xlu0 %156
    %158 = vrot.lane.b32.xlu0 %v113, 127
    %v159 = vpop.permute.xlu0 %158
    %160 = vrot.lane.b32.xlu0 %v114, 127
    %v161 = vpop.permute.xlu0 %160
    %162 = vrot.lane.b32.xlu0 %v115, 127
    %v163 = vpop.permute.xlu0 %162
    %v168 = vmin.f32 %v142, %v157
    %v169 = vmin.f32 %v143, %v159
    %v170 = vmin.f32 %v144, %v161
    %v171 = vmin.f32 %v145, %v163
    %v172 = vmax.f32 %v142, %v157
    %v173 = vmax.f32 %v143, %v159
    %v174 = vmax.f32 %v144, %v161
    %v175 = vmax.f32 %v145, %v163
    %177 = vrot.lane.b32.xlu0 %v121, 127
    %v178 = vpop.permute.xlu0 %177
    %v180 = vmin.f32 %v151, %v178
    %v181 = vmax.f32 %v151, %v178
    %vm187 = vcmask 1046528
    %v188 = vrot.slane %v138, 1
    %v189 = vrot.slane %v139, 1
    %v190 = vsel %vm187, %v188, %v189
    %v191 = vrot.slane %v140, 1
    %v192 = vsel %vm187, %v189, %v191
    %v193 = vrot.slane %v141, 1
    %v194 = vsel %vm187, %v191, %v193
    %v195 = vrot.slane %v150, 1
    %v196 = vsel %vm187, %v193, %v195
    %v201 = vmax.f32 %v138, %v190
    %v202 = vmax.f32 %v139, %v192
    %v203 = vmax.f32 %v140, %v194
    %v204 = vmax.f32 %v141, %v196
    %v210 = vrot.slane %v172, 1
    %v211 = vrot.slane %v173, 1
    %v212 = vsel %vm187, %v210, %v211
    %v213 = vrot.slane %v174, 1
    %v214 = vsel %vm187, %v211, %v213
    %v215 = vrot.slane %v175, 1
    %v216 = vsel %vm187, %v213, %v215
    %v217 = vrot.slane %v181, 1
    %v218 = vsel %vm187, %v215, %v217
    %v224 = vmin.f32 %v172, %v212
    %v225 = vmin.f32 %v173, %v214
    %v226 = vmin.f32 %v174, %v216
    %v227 = vmin.f32 %v175, %v218
    %v228 = vmin.f32 %v181, %v217
    %v234 = vrot.slane %v168, 1
    %v235 = vrot.slane %v169, 1
    %v236 = vsel %vm187, %v234, %v235
    %v237 = vrot.slane %v170, 1
    %v238 = vsel %vm187, %v235, %v237
    %v239 = vrot.slane %v171, 1
    %v240 = vsel %vm187, %v237, %v239
    %v241 = vrot.slane %v180, 1
    %v242 = vsel %vm187, %v239, %v241
    %v248 = vmin.f32 %v168, %v236
    %v249 = vmin.f32 %v169, %v238
    %v250 = vmin.f32 %v170, %v240
    %v251 = vmin.f32 %v171, %v242
    %v252 = vmin.f32 %v180, %v241
    %v253 = vmax.f32 %v168, %v236
    %v254 = vmax.f32 %v169, %v238
    %v255 = vmax.f32 %v170, %v240
    %v256 = vmax.f32 %v171, %v242
    %v257 = vmax.f32 %v180, %v241
    %vm258 = vcmask 1045504
    %v259 = vrot.slane %v138, 2
    %v260 = vrot.slane %v139, 2
    %v261 = vsel %vm258, %v259, %v260
    %v262 = vrot.slane %v140, 2
    %v263 = vsel %vm258, %v260, %v262
    %v264 = vrot.slane %v141, 2
    %v265 = vsel %vm258, %v262, %v264
    %v266 = vrot.slane %v150, 2
    %v267 = vsel %vm258, %v264, %v266
    %v272 = vmax.f32 %v201, %v261
    %v273 = vmax.f32 %v202, %v263
    %v274 = vmax.f32 %v203, %v265
    %v275 = vmax.f32 %v204, %v267
    %v281 = vrot.slane %v248, 1
    %v282 = vrot.slane %v249, 1
    %v283 = vsel %vm187, %v281, %v282
    %v284 = vrot.slane %v250, 1
    %v285 = vsel %vm187, %v282, %v284
    %v286 = vrot.slane %v251, 1
    %v287 = vsel %vm187, %v284, %v286
    %v288 = vrot.slane %v252, 1
    %v289 = vsel %vm187, %v286, %v288
    %v294 = vmax.f32 %v168, %v283
    %v295 = vmax.f32 %v169, %v285
    %v296 = vmax.f32 %v170, %v287
    %v297 = vmax.f32 %v171, %v289
    %v303 = vrot.slane %v224, 1
    %v304 = vrot.slane %v225, 1
    %v305 = vsel %vm187, %v303, %v304
    %v306 = vrot.slane %v226, 1
    %v307 = vsel %vm187, %v304, %v306
    %v308 = vrot.slane %v227, 1
    %v309 = vsel %vm187, %v306, %v308
    %v310 = vrot.slane %v228, 1
    %v311 = vsel %vm187, %v308, %v310
    %v316 = vmin.f32 %v172, %v305
    %v317 = vmin.f32 %v173, %v307
    %v318 = vmin.f32 %v174, %v309
    %v319 = vmin.f32 %v175, %v311
    %v325 = vrot.slane %v253, 1
    %v326 = vrot.slane %v254, 1
    %v327 = vsel %vm187, %v325, %v326
    %v328 = vrot.slane %v255, 1
    %v329 = vsel %vm187, %v326, %v328
    %v330 = vrot.slane %v256, 1
    %v331 = vsel %vm187, %v328, %v330
    %v332 = vrot.slane %v257, 1
    %v333 = vsel %vm187, %v330, %v332
    %v338 = vmin.f32 %v294, %v327
    %v339 = vmin.f32 %v295, %v329
    %v340 = vmin.f32 %v296, %v331
    %v341 = vmin.f32 %v297, %v333
    %v342 = vmin.f32 %v338, %v316
    %v343 = vmin.f32 %v339, %v317
    %v344 = vmin.f32 %v340, %v318
    %v345 = vmin.f32 %v341, %v319
    %v346 = vmax.f32 %v338, %v316
    %v347 = vmax.f32 %v339, %v317
    %v348 = vmax.f32 %v340, %v318
    %v349 = vmax.f32 %v341, %v319
    %v350 = vmax.f32 %v272, %v342
    %v351 = vmax.f32 %v273, %v343
    %v352 = vmax.f32 %v274, %v344
    %v353 = vmax.f32 %v275, %v345
    %v354 = vmin.f32 %v350, %v346
    %v355 = vmin.f32 %v351, %v347
    %v356 = vmin.f32 %v352, %v348
    %v357 = vmin.f32 %v353, %v349
    %v358 = vstv %s81
    %v359 = vmul.f32 %v354, %v358
    %v360 = vmul.f32 %v355, %v358
    %v361 = vmul.f32 %v356, %v358
    %v362 = vmul.f32 %v357, %v358
    %v363 = vstv %s82
    %v364 = vadd.f32 %v359, %v363
    %v365 = vadd.f32 %v360, %v363
    %v366 = vadd.f32 %v361, %v363
    %v367 = vadd.f32 %v362, %v363
    %v368 = vld [vmem:[#allocation7] sm:$0xff]
    %v369 = vld [vmem:[#allocation7 + $0x8] sm:$0xff]
    %v370 = vld [vmem:[#allocation7 + $0x10] sm:$0xff]
    %v371 = vld [vmem:[#allocation7 + $0x18] sm:$0xff]
    %v372 = vadd.f32 %v364, %v368
    %v373 = vadd.f32 %v365, %v369
    %v374 = vadd.f32 %v366, %v370
    %v375 = vadd.f32 %v367, %v371
    %v376 = vmax.f32 %v372, 1e-07
    %v377 = vmax.f32 %v373, 1e-07
    %v378 = vmax.f32 %v374, 1e-07
    %v379 = vmax.f32 %v375, 1e-07
    %v380 = vmin.f32 %v376, 0.9999999
    %v381 = vmin.f32 %v377, 0.9999999
    %v382 = vmin.f32 %v378, 0.9999999
    %v383 = vmin.f32 %v379, 0.9999999
    %vm384 = vcmp.eq.f32.partialorder %v83, 0.0
    %vm385 = vcmp.eq.f32.partialorder %v84, 0.0
    %vm386 = vcmp.eq.f32.partialorder %v85, 0.0
    %vm387 = vcmp.eq.f32.partialorder %v86, 0.0
    %v388 = vsel %vm384, 0.0, %v380
    %v389 = vsel %vm385, 0.0, %v381
    %v390 = vsel %vm386, 0.0, %v382
    %v391 = vsel %vm387, 0.0, %v383
    %s392 = scalar_lea.vmem [#allocation6], 40
    %v393 = vld [vmem:[%s392] sm:$0xff]
    %v394 = vld [vmem:[%s392 + $0x8] sm:$0xff]
    %v395 = vld [vmem:[%s392 + $0x10] sm:$0xff]
    %v396 = vld [vmem:[%s392 + $0x18] sm:$0xff]
    %v397 = vld [vmem:[%s392 + $0x20] sm:$0x3]
    %402 = vrot.lane.b32.xlu0 %v393, 127
    %v403 = vpop.permute.xlu0 %402
    %404 = vrot.lane.b32.xlu0 %v394, 127
    %v405 = vpop.permute.xlu0 %404
    %406 = vrot.lane.b32.xlu0 %v395, 127
    %v407 = vpop.permute.xlu0 %406
    %408 = vrot.lane.b32.xlu0 %v396, 127
    %v409 = vpop.permute.xlu0 %408
    %v414 = vmin.f32 %v393, %v403
    %v415 = vmin.f32 %v394, %v405
    %v416 = vmin.f32 %v395, %v407
    %v417 = vmin.f32 %v396, %v409
    %v418 = vmax.f32 %v393, %v403
    %v419 = vmax.f32 %v394, %v405
    %v420 = vmax.f32 %v395, %v407
    %v421 = vmax.f32 %v396, %v409
    %423 = vrot.lane.b32.xlu0 %v397, 127
    %v424 = vpop.permute.xlu0 %423
    %v426 = vmin.f32 %v397, %v424
    %v427 = vmax.f32 %v397, %v424
    %432 = vrot.lane.b32.xlu0 %v414, 127
    %v433 = vpop.permute.xlu0 %432
    %434 = vrot.lane.b32.xlu0 %v415, 127
    %v435 = vpop.permute.xlu0 %434
    %436 = vrot.lane.b32.xlu0 %v416, 127
    %v437 = vpop.permute.xlu0 %436
    %438 = vrot.lane.b32.xlu0 %v417, 127
    %v439 = vpop.permute.xlu0 %438
    %v444 = vmin.f32 %v393, %v433
    %v445 = vmin.f32 %v394, %v435
    %v446 = vmin.f32 %v395, %v437
    %v447 = vmin.f32 %v396, %v439
    %v448 = vmax.f32 %v393, %v433
    %v449 = vmax.f32 %v394, %v435
    %v450 = vmax.f32 %v395, %v437
    %v451 = vmax.f32 %v396, %v439
    %453 = vrot.lane.b32.xlu0 %v426, 127
    %v454 = vpop.permute.xlu0 %453
    %v456 = vmin.f32 %v397, %v454
    %v457 = vmax.f32 %v397, %v454
    %462 = vrot.lane.b32.xlu0 %v418, 127
    %v463 = vpop.permute.xlu0 %462
    %464 = vrot.lane.b32.xlu0 %v419, 127
    %v465 = vpop.permute.xlu0 %464
    %466 = vrot.lane.b32.xlu0 %v420, 127
    %v467 = vpop.permute.xlu0 %466
    %468 = vrot.lane.b32.xlu0 %v421, 127
    %v469 = vpop.permute.xlu0 %468
    %v474 = vmin.f32 %v448, %v463
    %v475 = vmin.f32 %v449, %v465
    %v476 = vmin.f32 %v450, %v467
    %v477 = vmin.f32 %v451, %v469
    %v478 = vmax.f32 %v448, %v463
    %v479 = vmax.f32 %v449, %v465
    %v480 = vmax.f32 %v450, %v467
    %v481 = vmax.f32 %v451, %v469
    %483 = vrot.lane.b32.xlu0 %v427, 127
    %v484 = vpop.permute.xlu0 %483
    %v486 = vmin.f32 %v457, %v484
    %v487 = vmax.f32 %v457, %v484
    %v493 = vrot.slane %v444, 1
    %v494 = vrot.slane %v445, 1
    %v495 = vsel %vm187, %v493, %v494
    %v496 = vrot.slane %v446, 1
    %v497 = vsel %vm187, %v494, %v496
    %v498 = vrot.slane %v447, 1
    %v499 = vsel %vm187, %v496, %v498
    %v500 = vrot.slane %v456, 1
    %v501 = vsel %vm187, %v498, %v500
    %v506 = vmax.f32 %v444, %v495
    %v507 = vmax.f32 %v445, %v497
    %v508 = vmax.f32 %v446, %v499
    %v509 = vmax.f32 %v447, %v501
    %v515 = vrot.slane %v478, 1
    %v516 = vrot.slane %v479, 1
    %v517 = vsel %vm187, %v515, %v516
    %v518 = vrot.slane %v480, 1
    %v519 = vsel %vm187, %v516, %v518
    %v520 = vrot.slane %v481, 1
    %v521 = vsel %vm187, %v518, %v520
    %v522 = vrot.slane %v487, 1
    %v523 = vsel %vm187, %v520, %v522
    %v529 = vmin.f32 %v478, %v517
    %v530 = vmin.f32 %v479, %v519
    %v531 = vmin.f32 %v480, %v521
    %v532 = vmin.f32 %v481, %v523
    %v533 = vmin.f32 %v487, %v522
    %v539 = vrot.slane %v474, 1
    %v540 = vrot.slane %v475, 1
    %v541 = vsel %vm187, %v539, %v540
    %v542 = vrot.slane %v476, 1
    %v543 = vsel %vm187, %v540, %v542
    %v544 = vrot.slane %v477, 1
    %v545 = vsel %vm187, %v542, %v544
    %v546 = vrot.slane %v486, 1
    %v547 = vsel %vm187, %v544, %v546
    %v553 = vmin.f32 %v474, %v541
    %v554 = vmin.f32 %v475, %v543
    %v555 = vmin.f32 %v476, %v545
    %v556 = vmin.f32 %v477, %v547
    %v557 = vmin.f32 %v486, %v546
    %v558 = vmax.f32 %v474, %v541
    %v559 = vmax.f32 %v475, %v543
    %v560 = vmax.f32 %v476, %v545
    %v561 = vmax.f32 %v477, %v547
    %v562 = vmax.f32 %v486, %v546
    %v563 = vrot.slane %v444, 2
    %v564 = vrot.slane %v445, 2
    %v565 = vsel %vm258, %v563, %v564
    %v566 = vrot.slane %v446, 2
    %v567 = vsel %vm258, %v564, %v566
    %v568 = vrot.slane %v447, 2
    %v569 = vsel %vm258, %v566, %v568
    %v570 = vrot.slane %v456, 2
    %v571 = vsel %vm258, %v568, %v570
    %v576 = vmax.f32 %v506, %v565
    %v577 = vmax.f32 %v507, %v567
    %v578 = vmax.f32 %v508, %v569
    %v579 = vmax.f32 %v509, %v571
    %v585 = vrot.slane %v553, 1
    %v586 = vrot.slane %v554, 1
    %v587 = vsel %vm187, %v585, %v586
    %v588 = vrot.slane %v555, 1
    %v589 = vsel %vm187, %v586, %v588
    %v590 = vrot.slane %v556, 1
    %v591 = vsel %vm187, %v588, %v590
    %v592 = vrot.slane %v557, 1
    %v593 = vsel %vm187, %v590, %v592
    %v598 = vmax.f32 %v474, %v587
    %v599 = vmax.f32 %v475, %v589
    %v600 = vmax.f32 %v476, %v591
    %v601 = vmax.f32 %v477, %v593
    %v607 = vrot.slane %v529, 1
    %v608 = vrot.slane %v530, 1
    %v609 = vsel %vm187, %v607, %v608
    %v610 = vrot.slane %v531, 1
    %v611 = vsel %vm187, %v608, %v610
    %v612 = vrot.slane %v532, 1
    %v613 = vsel %vm187, %v610, %v612
    %v614 = vrot.slane %v533, 1
    %v615 = vsel %vm187, %v612, %v614
    %v620 = vmin.f32 %v478, %v609
    %v621 = vmin.f32 %v479, %v611
    %v622 = vmin.f32 %v480, %v613
    %v623 = vmin.f32 %v481, %v615
    %v629 = vrot.slane %v558, 1
    %v630 = vrot.slane %v559, 1
    %v631 = vsel %vm187, %v629, %v630
    %v632 = vrot.slane %v560, 1
    %v633 = vsel %vm187, %v630, %v632
    %v634 = vrot.slane %v561, 1
    %v635 = vsel %vm187, %v632, %v634
    %v636 = vrot.slane %v562, 1
    %v637 = vsel %vm187, %v634, %v636
    %v642 = vmin.f32 %v598, %v631
    %v643 = vmin.f32 %v599, %v633
    %v644 = vmin.f32 %v600, %v635
    %v645 = vmin.f32 %v601, %v637
    %v646 = vmin.f32 %v642, %v620
    %v647 = vmin.f32 %v643, %v621
    %v648 = vmin.f32 %v644, %v622
    %v649 = vmin.f32 %v645, %v623
    %v650 = vmax.f32 %v642, %v620
    %v651 = vmax.f32 %v643, %v621
    %v652 = vmax.f32 %v644, %v622
    %v653 = vmax.f32 %v645, %v623
    %v654 = vmax.f32 %v576, %v646
    %v655 = vmax.f32 %v577, %v647
    %v656 = vmax.f32 %v578, %v648
    %v657 = vmax.f32 %v579, %v649
    %v658 = vmin.f32 %v654, %v650
    %v659 = vmin.f32 %v655, %v651
    %v660 = vmin.f32 %v656, %v652
    %v661 = vmin.f32 %v657, %v653
    %v662 = vmul.f32 %v658, %v358
    %v663 = vmul.f32 %v659, %v358
    %v664 = vmul.f32 %v660, %v358
    %v665 = vmul.f32 %v661, %v358
    %v666 = vadd.f32 %v662, %v363
    %v667 = vadd.f32 %v663, %v363
    %v668 = vadd.f32 %v664, %v363
    %v669 = vadd.f32 %v665, %v363
    %s670 = scalar_lea.vmem [#allocation7], 32
    %v671 = vld [vmem:[%s670] sm:$0xff]
    %v672 = vld [vmem:[%s670 + $0x8] sm:$0xff]
    %v673 = vld [vmem:[%s670 + $0x10] sm:$0xff]
    %v674 = vld [vmem:[%s670 + $0x18] sm:$0xff]
    %v675 = vadd.f32 %v666, %v671
    %v676 = vadd.f32 %v667, %v672
    %v677 = vadd.f32 %v668, %v673
    %v678 = vadd.f32 %v669, %v674
    %v679 = vmax.f32 %v675, 1e-07
    %v680 = vmax.f32 %v676, 1e-07
    %v681 = vmax.f32 %v677, 1e-07
    %v682 = vmax.f32 %v678, 1e-07
    %v683 = vmin.f32 %v679, 0.9999999
    %v684 = vmin.f32 %v680, 0.9999999
    %v685 = vmin.f32 %v681, 0.9999999
    %v686 = vmin.f32 %v682, 0.9999999
    %v687 = vsel %vm384, 0.0, %v683
    %v688 = vsel %vm385, 0.0, %v684
    %v689 = vsel %vm386, 0.0, %v685
    %v690 = vsel %vm387, 0.0, %v686
    %s691 = scalar_lea.vmem [#allocation6], 80
    %v692 = vld [vmem:[%s691] sm:$0xff]
    %v693 = vld [vmem:[%s691 + $0x8] sm:$0xff]
    %v694 = vld [vmem:[%s691 + $0x10] sm:$0xff]
    %v695 = vld [vmem:[%s691 + $0x18] sm:$0xff]
    %v696 = vld [vmem:[%s691 + $0x20] sm:$0x3]
    %701 = vrot.lane.b32.xlu0 %v692, 127
    %v702 = vpop.permute.xlu0 %701
    %703 = vrot.lane.b32.xlu0 %v693, 127
    %v704 = vpop.permute.xlu0 %703
    %705 = vrot.lane.b32.xlu0 %v694, 127
    %v706 = vpop.permute.xlu0 %705
    %707 = vrot.lane.b32.xlu0 %v695, 127
    %v708 = vpop.permute.xlu0 %707
    %v713 = vmin.f32 %v692, %v702
    %v714 = vmin.f32 %v693, %v704
    %v715 = vmin.f32 %v694, %v706
    %v716 = vmin.f32 %v695, %v708
    %v717 = vmax.f32 %v692, %v702
    %v718 = vmax.f32 %v693, %v704
    %v719 = vmax.f32 %v694, %v706
    %v720 = vmax.f32 %v695, %v708
    %722 = vrot.lane.b32.xlu0 %v696, 127
    %v723 = vpop.permute.xlu0 %722
    %v725 = vmin.f32 %v696, %v723
    %v726 = vmax.f32 %v696, %v723
    %731 = vrot.lane.b32.xlu0 %v713, 127
    %v732 = vpop.permute.xlu0 %731
    %733 = vrot.lane.b32.xlu0 %v714, 127
    %v734 = vpop.permute.xlu0 %733
    %735 = vrot.lane.b32.xlu0 %v715, 127
    %v736 = vpop.permute.xlu0 %735
    %737 = vrot.lane.b32.xlu0 %v716, 127
    %v738 = vpop.permute.xlu0 %737
    %v743 = vmin.f32 %v692, %v732
    %v744 = vmin.f32 %v693, %v734
    %v745 = vmin.f32 %v694, %v736
    %v746 = vmin.f32 %v695, %v738
    %v747 = vmax.f32 %v692, %v732
    %v748 = vmax.f32 %v693, %v734
    %v749 = vmax.f32 %v694, %v736
    %v750 = vmax.f32 %v695, %v738
    %752 = vrot.lane.b32.xlu0 %v725, 127
    %v753 = vpop.permute.xlu0 %752
    %v755 = vmin.f32 %v696, %v753
    %v756 = vmax.f32 %v696, %v753
    %761 = vrot.lane.b32.xlu0 %v717, 127
    %v762 = vpop.permute.xlu0 %761
    %763 = vrot.lane.b32.xlu0 %v718, 127
    %v764 = vpop.permute.xlu0 %763
    %765 = vrot.lane.b32.xlu0 %v719, 127
    %v766 = vpop.permute.xlu0 %765
    %767 = vrot.lane.b32.xlu0 %v720, 127
    %v768 = vpop.permute.xlu0 %767
    %v773 = vmin.f32 %v747, %v762
    %v774 = vmin.f32 %v748, %v764
    %v775 = vmin.f32 %v749, %v766
    %v776 = vmin.f32 %v750, %v768
    %v777 = vmax.f32 %v747, %v762
    %v778 = vmax.f32 %v748, %v764
    %v779 = vmax.f32 %v749, %v766
    %v780 = vmax.f32 %v750, %v768
    %782 = vrot.lane.b32.xlu0 %v726, 127
    %v783 = vpop.permute.xlu0 %782
    %v785 = vmin.f32 %v756, %v783
    %v786 = vmax.f32 %v756, %v783
    %v792 = vrot.slane %v743, 1
    %v793 = vrot.slane %v744, 1
    %v794 = vsel %vm187, %v792, %v793
    %v795 = vrot.slane %v745, 1
    %v796 = vsel %vm187, %v793, %v795
    %v797 = vrot.slane %v746, 1
    %v798 = vsel %vm187, %v795, %v797
    %v799 = vrot.slane %v755, 1
    %v800 = vsel %vm187, %v797, %v799
    %v805 = vmax.f32 %v743, %v794
    %v806 = vmax.f32 %v744, %v796
    %v807 = vmax.f32 %v745, %v798
    %v808 = vmax.f32 %v746, %v800
    %v814 = vrot.slane %v777, 1
    %v815 = vrot.slane %v778, 1
    %v816 = vsel %vm187, %v814, %v815
    %v817 = vrot.slane %v779, 1
    %v818 = vsel %vm187, %v815, %v817
    %v819 = vrot.slane %v780, 1
    %v820 = vsel %vm187, %v817, %v819
    %v821 = vrot.slane %v786, 1
    %v822 = vsel %vm187, %v819, %v821
    %v828 = vmin.f32 %v777, %v816
    %v829 = vmin.f32 %v778, %v818
    %v830 = vmin.f32 %v779, %v820
    %v831 = vmin.f32 %v780, %v822
    %v832 = vmin.f32 %v786, %v821
    %v838 = vrot.slane %v773, 1
    %v839 = vrot.slane %v774, 1
    %v840 = vsel %vm187, %v838, %v839
    %v841 = vrot.slane %v775, 1
    %v842 = vsel %vm187, %v839, %v841
    %v843 = vrot.slane %v776, 1
    %v844 = vsel %vm187, %v841, %v843
    %v845 = vrot.slane %v785, 1
    %v846 = vsel %vm187, %v843, %v845
    %v852 = vmin.f32 %v773, %v840
    %v853 = vmin.f32 %v774, %v842
    %v854 = vmin.f32 %v775, %v844
    %v855 = vmin.f32 %v776, %v846
    %v856 = vmin.f32 %v785, %v845
    %v857 = vmax.f32 %v773, %v840
    %v858 = vmax.f32 %v774, %v842
    %v859 = vmax.f32 %v775, %v844
    %v860 = vmax.f32 %v776, %v846
    %v861 = vmax.f32 %v785, %v845
    %v862 = vrot.slane %v743, 2
    %v863 = vrot.slane %v744, 2
    %v864 = vsel %vm258, %v862, %v863
    %v865 = vrot.slane %v745, 2
    %v866 = vsel %vm258, %v863, %v865
    %v867 = vrot.slane %v746, 2
    %v868 = vsel %vm258, %v865, %v867
    %v869 = vrot.slane %v755, 2
    %v870 = vsel %vm258, %v867, %v869
    %v875 = vmax.f32 %v805, %v864
    %v876 = vmax.f32 %v806, %v866
    %v877 = vmax.f32 %v807, %v868
    %v878 = vmax.f32 %v808, %v870
    %v884 = vrot.slane %v852, 1
    %v885 = vrot.slane %v853, 1
    %v886 = vsel %vm187, %v884, %v885
    %v887 = vrot.slane %v854, 1
    %v888 = vsel %vm187, %v885, %v887
    %v889 = vrot.slane %v855, 1
    %v890 = vsel %vm187, %v887, %v889
    %v891 = vrot.slane %v856, 1
    %v892 = vsel %vm187, %v889, %v891
    %v897 = vmax.f32 %v773, %v886
    %v898 = vmax.f32 %v774, %v888
    %v899 = vmax.f32 %v775, %v890
    %v900 = vmax.f32 %v776, %v892
    %v906 = vrot.slane %v828, 1
    %v907 = vrot.slane %v829, 1
    %v908 = vsel %vm187, %v906, %v907
    %v909 = vrot.slane %v830, 1
    %v910 = vsel %vm187, %v907, %v909
    %v911 = vrot.slane %v831, 1
    %v912 = vsel %vm187, %v909, %v911
    %v913 = vrot.slane %v832, 1
    %v914 = vsel %vm187, %v911, %v913
    %v919 = vmin.f32 %v777, %v908
    %v920 = vmin.f32 %v778, %v910
    %v921 = vmin.f32 %v779, %v912
    %v922 = vmin.f32 %v780, %v914
    %v928 = vrot.slane %v857, 1
    %v929 = vrot.slane %v858, 1
    %v930 = vsel %vm187, %v928, %v929
    %v931 = vrot.slane %v859, 1
    %v932 = vsel %vm187, %v929, %v931
    %v933 = vrot.slane %v860, 1
    %v934 = vsel %vm187, %v931, %v933
    %v935 = vrot.slane %v861, 1
    %v936 = vsel %vm187, %v933, %v935
    %v941 = vmin.f32 %v897, %v930
    %v942 = vmin.f32 %v898, %v932
    %v943 = vmin.f32 %v899, %v934
    %v944 = vmin.f32 %v900, %v936
    %v945 = vmin.f32 %v941, %v919
    %v946 = vmin.f32 %v942, %v920
    %v947 = vmin.f32 %v943, %v921
    %v948 = vmin.f32 %v944, %v922
    %v949 = vmax.f32 %v941, %v919
    %v950 = vmax.f32 %v942, %v920
    %v951 = vmax.f32 %v943, %v921
    %v952 = vmax.f32 %v944, %v922
    %v953 = vmax.f32 %v875, %v945
    %v954 = vmax.f32 %v876, %v946
    %v955 = vmax.f32 %v877, %v947
    %v956 = vmax.f32 %v878, %v948
    %v957 = vmin.f32 %v953, %v949
    %v958 = vmin.f32 %v954, %v950
    %v959 = vmin.f32 %v955, %v951
    %v960 = vmin.f32 %v956, %v952
    %v961 = vmul.f32 %v957, %v358
    %v962 = vmul.f32 %v958, %v358
    %v963 = vmul.f32 %v959, %v358
    %v964 = vmul.f32 %v960, %v358
    %v965 = vadd.f32 %v961, %v363
    %v966 = vadd.f32 %v962, %v363
    %v967 = vadd.f32 %v963, %v363
    %v968 = vadd.f32 %v964, %v363
    %s969 = scalar_lea.vmem [#allocation7], 64
    %v970 = vld [vmem:[%s969] sm:$0xff]
    %v971 = vld [vmem:[%s969 + $0x8] sm:$0xff]
    %v972 = vld [vmem:[%s969 + $0x10] sm:$0xff]
    %v973 = vld [vmem:[%s969 + $0x18] sm:$0xff]
    %v974 = vadd.f32 %v965, %v970
    %v975 = vadd.f32 %v966, %v971
    %v976 = vadd.f32 %v967, %v972
    %v977 = vadd.f32 %v968, %v973
    %v978 = vmax.f32 %v974, 1e-07
    %v979 = vmax.f32 %v975, 1e-07
    %v980 = vmax.f32 %v976, 1e-07
    %v981 = vmax.f32 %v977, 1e-07
    %v982 = vmin.f32 %v978, 0.9999999
    %v983 = vmin.f32 %v979, 0.9999999
    %v984 = vmin.f32 %v980, 0.9999999
    %v985 = vmin.f32 %v981, 0.9999999
    %v986 = vsel %vm384, 0.0, %v982
    %v987 = vsel %vm385, 0.0, %v983
    %v988 = vsel %vm386, 0.0, %v984
    %v989 = vsel %vm387, 0.0, %v985
    %v990 = vld [vmem:[%s5] sm:$0xff]
    %v991 = vld [vmem:[%s5 + $0x8] sm:$0xff]
    %v992 = vld [vmem:[%s5 + $0x10] sm:$0xff]
    %v993 = vld [vmem:[%s5 + $0x18] sm:$0xff]
    %vm994 = vcmask 261120
    %v996 = vsel %vm994, %v388, 0
    %v999 = vsel %vm994, %v389, 0
    %v1002 = vsel %vm994, %v390, 0
    %v1005 = vsel %vm994, %v391, 0
    %v1008 = vsel %vm994, %v687, 0
    %v1011 = vsel %vm994, %v688, 0
    %v1014 = vsel %vm994, %v689, 0
    %v1017 = vsel %vm994, %v690, 0
    %v1020 = vsel %vm994, %v986, 0
    %v1023 = vsel %vm994, %v987, 0
    %v1026 = vsel %vm994, %v988, 0
    %v1029 = vsel %vm994, %v989, 0
    %1031 = vmatprep.subr.mxu0 0.0
    %1032 = vmatpush1.msra.mxu0 %v990
    %1033 = vmatprep.subr.mxu0 0.0
    %1034 = vmatpush1.msra.mxu0 %v991
    %1035 = vmatprep.subr.mxu0 0.0
    %1036 = vmatpush1.msra.mxu0 %v992
    %1037 = vmatprep.subr.mxu0 0.0
    %1038 = vmatpush1.msra.mxu0 %v993
    %1039 = vmatprep.subr.mxu0 0.0
    %1040 = vmatpush1.msra.mxu0 0.0
    %1041 = vmatprep.subr.mxu0 0.0
    %1042 = vmatpush1.msra.mxu0 0.0
    %1043 = vmatprep.subr.mxu0 0.0
    %1044 = vmatpush1.msra.mxu0 0.0
    %1045 = vmatprep.subr.mxu0 0.0
    %1046 = vmatpush1.msra.mxu0 0.0
    %1047 = vmatprep.subr.mxu0 0.0
    %1048 = vmatpush1.msra.mxu0 0.0
    %1049 = vmatprep.subr.mxu0 0.0
    %1050 = vmatpush1.msra.mxu0 0.0
    %1051 = vmatprep.subr.mxu0 0.0
    %1052 = vmatpush1.msra.mxu0 0.0
    %1053 = vmatprep.subr.mxu0 0.0
    %1054 = vmatpush1.msra.mxu0 0.0
    %1055 = vmatprep.subr.mxu0 0.0
    %1056 = vmatpush1.msra.mxu0 0.0
    %1057 = vmatprep.subr.mxu0 0.0
    %1058 = vmatpush1.msra.mxu0 0.0
    %1059 = vmatprep.subr.mxu0 0.0
    %1060 = vmatpush1.msra.mxu0 0.0
    %1061 = vmatprep.subr.mxu0 0.0
    %1062 = vmatpush1.msra.mxu0 0.0
    %1063 = vmatprep.subr.mxu0 0.0
    %1064 = vmatpush1.msra.mxu0 0.0
    %1065 = vmatprep.subr.mxu0 0.0
    %1066 = vmatpush1.msra.mxu0 0.0
    %1067 = vmatprep.subr.mxu0 0.0
    %1068 = vmatpush1.msra.mxu0 0.0
    %1069 = vmatprep.subr.mxu0 0.0
    %1070 = vmatpush1.msra.mxu0 0.0
    %1071 = vmatprep.subr.mxu0 0.0
    %1072 = vmatpush1.msra.mxu0 0.0
    %1073 = vmatprep.subr.mxu0 0.0
    %1074 = vmatpush1.msra.mxu0 0.0
    %1075 = vmatprep.subr.mxu0 0.0
    %1076 = vmatpush1.msra.mxu0 0.0
    %1077 = vmatprep.subr.mxu0 0.0
    %1078 = vmatpush1.msra.mxu0 0.0
    %1079 = vmatprep.subr.mxu0 0.0
    %1080 = vmatpush1.msra.mxu0 0.0
    %1081 = vmatprep.subr.mxu0 0.0
    %1082 = vmatpush1.msra.mxu0 0.0
    %1083 = vmatprep.subr.mxu0 0.0
    %1084 = vmatpush1.msra.mxu0 0.0
    %1085 = vmatprep.subr.mxu0 0.0
    %1086 = vmatpush1.msra.mxu0 0.0
    %1087 = vmatprep.subr.mxu0 0.0
    %1088 = vmatpush1.msra.mxu0 0.0
    %1089 = vmatprep.subr.mxu0 0.0
    %1090 = vmatpush1.msra.mxu0 0.0
    %1091 = vmatprep.subr.mxu0 0.0
    %1092 = vmatpush1.msra.mxu0 0.0
    %1093 = vmatprep.subr.mxu0 0.0
    %1094 = vmatpush1.msra.mxu0 0.0
    %1095 = vmatprep.mubr.f32.mxu0 0.0
    %1096 = vmatmul.mubr.f32.gmra.mrb[0].mxu0 %v996
    %v1097 = vpop.f32.mrb[0].mxu0
    %v1098 = vadd.f32 0.0, %v1097
    %v1099 = vpop.f32.mrb[0].mxu0
    %1100 = vmatprep.mubr.f32.mxu0 0.0
    %1101 = vmatmul.mubr.f32.gmra.mrb[0].mxu0 %v999
    %v1102 = vpop.f32.mrb[0].mxu0
    %v1103 = vadd.f32 0.0, %v1102
    %v1104 = vpop.f32.mrb[0].mxu0
    %1105 = vmatprep.mubr.f32.mxu0 0.0
    %1106 = vmatmul.mubr.f32.gmra.mrb[0].mxu0 %v1002
    %v1107 = vpop.f32.mrb[0].mxu0
    %v1108 = vadd.f32 0.0, %v1107
    %v1109 = vpop.f32.mrb[0].mxu0
    %1110 = vmatprep.mubr.f32.mxu0 0.0
    %1111 = vmatmul.mubr.f32.gmra.mrb[0].mxu0 %v1005
    %v1112 = vpop.f32.mrb[0].mxu0
    %v1113 = vadd.f32 0.0, %v1112
    %v1114 = vpop.f32.mrb[0].mxu0
    %1115 = vmatprep.mubr.f32.mxu0 0.0
    %1116 = vmatmul.mubr.f32.gmra.mrb[0].mxu0 %v1008
    %v1117 = vpop.f32.mrb[0].mxu0
    %v1118 = vadd.f32 0.0, %v1117
    %v1119 = vpop.f32.mrb[0].mxu0
    %1120 = vmatprep.mubr.f32.mxu0 0.0
    %1121 = vmatmul.mubr.f32.gmra.mrb[0].mxu0 %v1011
    %v1122 = vpop.f32.mrb[0].mxu0
    %v1123 = vadd.f32 0.0, %v1122
    %v1124 = vpop.f32.mrb[0].mxu0
    %1125 = vmatprep.mubr.f32.mxu0 0.0
    %1126 = vmatmul.mubr.f32.gmra.mrb[0].mxu0 %v1014
    %v1127 = vpop.f32.mrb[0].mxu0
    %v1128 = vadd.f32 0.0, %v1127
    %v1129 = vpop.f32.mrb[0].mxu0
    %1130 = vmatprep.mubr.f32.mxu0 0.0
    %1131 = vmatmul.mubr.f32.gmra.mrb[0].mxu0 %v1017
    %v1132 = vpop.f32.mrb[0].mxu0
    %v1133 = vadd.f32 0.0, %v1132
    %v1134 = vpop.f32.mrb[0].mxu0
    %1135 = vmatprep.mubr.f32.mxu0 0.0
    %1136 = vmatmul.mubr.f32.gmra.mrb[0].mxu0 %v1020
    %v1137 = vpop.f32.mrb[0].mxu0
    %v1138 = vadd.f32 0.0, %v1137
    %v1139 = vpop.f32.mrb[0].mxu0
    %1140 = vmatprep.mubr.f32.mxu0 0.0
    %1141 = vmatmul.mubr.f32.gmra.mrb[0].mxu0 %v1023
    %v1142 = vpop.f32.mrb[0].mxu0
    %v1143 = vadd.f32 0.0, %v1142
    %v1144 = vpop.f32.mrb[0].mxu0
    %1145 = vmatprep.mubr.f32.mxu0 0.0
    %1146 = vmatmul.mubr.f32.gmra.mrb[0].mxu0 %v1026
    %v1147 = vpop.f32.mrb[0].mxu0
    %v1148 = vadd.f32 0.0, %v1147
    %v1149 = vpop.f32.mrb[0].mxu0
    %1150 = vmatprep.mubr.f32.mxu0 0.0
    %1151 = vmatmul.mubr.f32.gmra.mrb[0].mxu0 %v1029
    %v1152 = vpop.f32.mrb[0].mxu0
    %v1153 = vadd.f32 0.0, %v1152
    %v1154 = vpop.f32.mrb[0].mxu0
    %1155 = vdwg.mxu0
    %v1156 = vld [vmem:[%s4] sm:$0xff]
    %v1157 = vld [vmem:[%s4 + $0x8] sm:$0xff]
    %v1158 = vld [vmem:[%s4 + $0x10] sm:$0xff]
    %v1159 = vld [vmem:[%s4 + $0x18] sm:$0xff]
    %v1160 = vld [vmem:[%s4 + $0x20] sm:$0xff]
    %v1161 = vld [vmem:[%s4 + $0x28] sm:$0xff]
    %v1163 = vsel %vm994, %v1156, 0
    %v1166 = vsel %vm994, %v1157, 0
    %v1169 = vsel %vm994, %v1158, 0
    %v1172 = vsel %vm994, %v1159, 0
    %v1175 = vsel %vm994, %v1160, 0
    %v1178 = vsel %vm994, %v1161, 0
    %1180 = vmatprep.subr.mxu0 0.0
    %1181 = vmatpush1.msra.mxu0 %v1098
    %1182 = vmatprep.subr.mxu0 0.0
    %1183 = vmatpush1.msra.mxu0 %v1103
    %1184 = vmatprep.subr.mxu0 0.0
    %1185 = vmatpush1.msra.mxu0 %v1108
    %1186 = vmatprep.subr.mxu0 0.0
    %1187 = vmatpush1.msra.mxu0 %v1113
    %1188 = vmatprep.subr.mxu0 0.0
    %1189 = vmatpush1.msra.mxu0 0.0
    %1190 = vmatprep.subr.mxu0 0.0
    %1191 = vmatpush1.msra.mxu0 0.0
    %1192 = vmatprep.subr.mxu0 0.0
    %1193 = vmatpush1.msra.mxu0 0.0
    %1194 = vmatprep.subr.mxu0 0.0
    %1195 = vmatpush1.msra.mxu0 0.0
    %1196 = vmatprep.subr.mxu0 0.0
    %1197 = vmatpush1.msra.mxu0 0.0
    %1198 = vmatprep.subr.mxu0 0.0
    %1199 = vmatpush1.msra.mxu0 0.0
    %1200 = vmatprep.subr.mxu0 0.0
    %1201 = vmatpush1.msra.mxu0 0.0
    %1202 = vmatprep.subr.mxu0 0.0
    %1203 = vmatpush1.msra.mxu0 0.0
    %1204 = vmatprep.subr.mxu0 0.0
    %1205 = vmatpush1.msra.mxu0 0.0
    %1206 = vmatprep.subr.mxu0 0.0
    %1207 = vmatpush1.msra.mxu0 0.0
    %1208 = vmatprep.subr.mxu0 0.0
    %1209 = vmatpush1.msra.mxu0 0.0
    %1210 = vmatprep.subr.mxu0 0.0
    %1211 = vmatpush1.msra.mxu0 0.0
    %1212 = vmatprep.subr.mxu0 0.0
    %1213 = vmatpush1.msra.mxu0 0.0
    %1214 = vmatprep.subr.mxu0 0.0
    %1215 = vmatpush1.msra.mxu0 0.0
    %1216 = vmatprep.subr.mxu0 0.0
    %1217 = vmatpush1.msra.mxu0 0.0
    %1218 = vmatprep.subr.mxu0 0.0
    %1219 = vmatpush1.msra.mxu0 0.0
    %1220 = vmatprep.subr.mxu0 0.0
    %1221 = vmatpush1.msra.mxu0 0.0
    %1222 = vmatprep.subr.mxu0 0.0
    %1223 = vmatpush1.msra.mxu0 0.0
    %1224 = vmatprep.subr.mxu0 0.0
    %1225 = vmatpush1.msra.mxu0 0.0
    %1226 = vmatprep.subr.mxu0 0.0
    %1227 = vmatpush1.msra.mxu0 0.0
    %1228 = vmatprep.subr.mxu0 0.0
    %1229 = vmatpush1.msra.mxu0 0.0
    %1230 = vmatprep.subr.mxu0 0.0
    %1231 = vmatpush1.msra.mxu0 0.0
    %1232 = vmatprep.subr.mxu0 0.0
    %1233 = vmatpush1.msra.mxu0 0.0
    %1234 = vmatprep.subr.mxu0 0.0
    %1235 = vmatpush1.msra.mxu0 0.0
    %1236 = vmatprep.subr.mxu0 0.0
    %1237 = vmatpush1.msra.mxu0 0.0
    %1238 = vmatprep.subr.mxu0 0.0
    %1239 = vmatpush1.msra.mxu0 0.0
    %1240 = vmatprep.subr.mxu0 0.0
    %1241 = vmatpush1.msra.mxu0 0.0
    %1242 = vmatprep.subr.mxu0 0.0
    %1243 = vmatpush1.msra.mxu0 0.0
    %1244 = vmatprep.mubr.f32.mxu0 0.0
    %1245 = vmatmul.mubr.f32.gmra.mrb[0].mxu0 %v1163
    %v1246 = vpop.f32.mrb[0].mxu0
    %v1247 = vadd.f32 0.0, %v1246
    %v1248 = vpop.f32.mrb[0].mxu0
    %1249 = vmatprep.mubr.f32.mxu0 0.0
    %1250 = vmatmul.mubr.f32.gmra.mrb[0].mxu0 %v1166
    %v1251 = vpop.f32.mrb[0].mxu0
    %v1252 = vadd.f32 0.0, %v1251
    %v1253 = vpop.f32.mrb[0].mxu0
    %1254 = vmatprep.mubr.f32.mxu0 0.0
    %1255 = vmatmul.mubr.f32.gmra.mrb[0].mxu0 %v1169
    %v1256 = vpop.f32.mrb[0].mxu0
    %v1257 = vadd.f32 0.0, %v1256
    %v1258 = vpop.f32.mrb[0].mxu0
    %1259 = vmatprep.mubr.f32.mxu0 0.0
    %1260 = vmatmul.mubr.f32.gmra.mrb[0].mxu0 %v1172
    %v1261 = vpop.f32.mrb[0].mxu0
    %v1262 = vadd.f32 0.0, %v1261
    %v1263 = vpop.f32.mrb[0].mxu0
    %1264 = vmatprep.mubr.f32.mxu0 0.0
    %1265 = vmatmul.mubr.f32.gmra.mrb[0].mxu0 %v1175
    %v1266 = vpop.f32.mrb[0].mxu0
    %v1267 = vadd.f32 0.0, %v1266
    %v1268 = vpop.f32.mrb[0].mxu0
    %1269 = vmatprep.mubr.f32.mxu0 0.0
    %1270 = vmatmul.mubr.f32.gmra.mrb[0].mxu0 %v1178
    %v1271 = vpop.f32.mrb[0].mxu0
    %v1272 = vadd.f32 0.0, %v1271
    %v1273 = vpop.f32.mrb[0].mxu0
    %1274 = vdwg.mxu0
    %vm1275 = vcmp.eq.f32.partialorder %v1247, 0.0
    %vm1276 = vcmp.eq.f32.partialorder %v1252, 0.0
    %vm1277 = vcmp.eq.f32.partialorder %v1257, 0.0
    %vm1278 = vcmp.eq.f32.partialorder %v1262, 0.0
    %vm1279 = vcmp.eq.f32.partialorder %v1267, 0.0
    %vm1280 = vcmp.eq.f32.partialorder %v1272, 0.0
    %v1281 = vld [vmem:[#allocation9] sm:$0xff]
    %v1282 = vld [vmem:[#allocation9 + $0x8] sm:$0xff]
    %v1283 = vld [vmem:[#allocation9 + $0x10] sm:$0xff]
    %v1284 = vld [vmem:[#allocation9 + $0x18] sm:$0xff]
    %v1285 = vld [vmem:[#allocation9 + $0x20] sm:$0xff]
    %v1286 = vld [vmem:[#allocation9 + $0x28] sm:$0xff]
    %v1287 = vsel %vm1275, %v1281, %v1247
    %v1288 = vsel %vm1276, %v1282, %v1252
    %v1289 = vsel %vm1277, %v1283, %v1257
    %v1290 = vsel %vm1278, %v1284, %v1262
    %v1291 = vsel %vm1279, %v1285, %v1267
    %v1292 = vsel %vm1280, %v1286, %v1272
    %vm1293 = vcmask 392192
    %1294 = vst.msk [vmem:[#allocation10] sm:$0xff] %vm1293, %v1287
    %1295 = vst.msk [vmem:[#allocation10 + $0x8] sm:$0xff] %vm1293, %v1288
    %1296 = vst.msk [vmem:[#allocation10 + $0x10] sm:$0xff] %vm1293, %v1289
    %1297 = vst.msk [vmem:[#allocation10 + $0x18] sm:$0xff] %vm1293, %v1290
    %1298 = vst.msk [vmem:[#allocation10 + $0x20] sm:$0xff] %vm1293, %v1291
    %1299 = vst.msk [vmem:[#allocation10 + $0x28] sm:$0xff] %vm1293, %v1292
    %1300 = vmatprep.subr.mxu0 0.0
    %1301 = vmatpush1.msra.mxu0 %v1118
    %1302 = vmatprep.subr.mxu0 0.0
    %1303 = vmatpush1.msra.mxu0 %v1123
    %1304 = vmatprep.subr.mxu0 0.0
    %1305 = vmatpush1.msra.mxu0 %v1128
    %1306 = vmatprep.subr.mxu0 0.0
    %1307 = vmatpush1.msra.mxu0 %v1133
    %1308 = vmatprep.subr.mxu0 0.0
    %1309 = vmatpush1.msra.mxu0 0.0
    %1310 = vmatprep.subr.mxu0 0.0
    %1311 = vmatpush1.msra.mxu0 0.0
    %1312 = vmatprep.subr.mxu0 0.0
    %1313 = vmatpush1.msra.mxu0 0.0
    %1314 = vmatprep.subr.mxu0 0.0
    %1315 = vmatpush1.msra.mxu0 0.0
    %1316 = vmatprep.subr.mxu0 0.0
    %1317 = vmatpush1.msra.mxu0 0.0
    %1318 = vmatprep.subr.mxu0 0.0
    %1319 = vmatpush1.msra.mxu0 0.0
    %1320 = vmatprep.subr.mxu0 0.0
    %1321 = vmatpush1.msra.mxu0 0.0
    %1322 = vmatprep.subr.mxu0 0.0
    %1323 = vmatpush1.msra.mxu0 0.0
    %1324 = vmatprep.subr.mxu0 0.0
    %1325 = vmatpush1.msra.mxu0 0.0
    %1326 = vmatprep.subr.mxu0 0.0
    %1327 = vmatpush1.msra.mxu0 0.0
    %1328 = vmatprep.subr.mxu0 0.0
    %1329 = vmatpush1.msra.mxu0 0.0
    %1330 = vmatprep.subr.mxu0 0.0
    %1331 = vmatpush1.msra.mxu0 0.0
    %1332 = vmatprep.subr.mxu0 0.0
    %1333 = vmatpush1.msra.mxu0 0.0
    %1334 = vmatprep.subr.mxu0 0.0
    %1335 = vmatpush1.msra.mxu0 0.0
    %1336 = vmatprep.subr.mxu0 0.0
    %1337 = vmatpush1.msra.mxu0 0.0
    %1338 = vmatprep.subr.mxu0 0.0
    %1339 = vmatpush1.msra.mxu0 0.0
    %1340 = vmatprep.subr.mxu0 0.0
    %1341 = vmatpush1.msra.mxu0 0.0
    %1342 = vmatprep.subr.mxu0 0.0
    %1343 = vmatpush1.msra.mxu0 0.0
    %1344 = vmatprep.subr.mxu0 0.0
    %1345 = vmatpush1.msra.mxu0 0.0
    %1346 = vmatprep.subr.mxu0 0.0
    %1347 = vmatpush1.msra.mxu0 0.0
    %1348 = vmatprep.subr.mxu0 0.0
    %1349 = vmatpush1.msra.mxu0 0.0
    %1350 = vmatprep.subr.mxu0 0.0
    %1351 = vmatpush1.msra.mxu0 0.0
    %1352 = vmatprep.subr.mxu0 0.0
    %1353 = vmatpush1.msra.mxu0 0.0
    %1354 = vmatprep.subr.mxu0 0.0
    %1355 = vmatpush1.msra.mxu0 0.0
    %1356 = vmatprep.subr.mxu0 0.0
    %1357 = vmatpush1.msra.mxu0 0.0
    %1358 = vmatprep.subr.mxu0 0.0
    %1359 = vmatpush1.msra.mxu0 0.0
    %1360 = vmatprep.subr.mxu0 0.0
    %1361 = vmatpush1.msra.mxu0 0.0
    %1362 = vmatprep.subr.mxu0 0.0
    %1363 = vmatpush1.msra.mxu0 0.0
    %1364 = vmatprep.mubr.f32.mxu0 0.0
    %1365 = vmatmul.mubr.f32.gmra.mrb[0].mxu0 %v1163
    %v1366 = vpop.f32.mrb[0].mxu0
    %v1367 = vadd.f32 0.0, %v1366
    %v1368 = vpop.f32.mrb[0].mxu0
    %1369 = vmatprep.mubr.f32.mxu0 0.0
    %1370 = vmatmul.mubr.f32.gmra.mrb[0].mxu0 %v1166
    %v1371 = vpop.f32.mrb[0].mxu0
    %v1372 = vadd.f32 0.0, %v1371
    %v1373 = vpop.f32.mrb[0].mxu0
    %1374 = vmatprep.mubr.f32.mxu0 0.0
    %1375 = vmatmul.mubr.f32.gmra.mrb[0].mxu0 %v1169
    %v1376 = vpop.f32.mrb[0].mxu0
    %v1377 = vadd.f32 0.0, %v1376
    %v1378 = vpop.f32.mrb[0].mxu0
    %1379 = vmatprep.mubr.f32.mxu0 0.0
    %1380 = vmatmul.mubr.f32.gmra.mrb[0].mxu0 %v1172
    %v1381 = vpop.f32.mrb[0].mxu0
    %v1382 = vadd.f32 0.0, %v1381
    %v1383 = vpop.f32.mrb[0].mxu0
    %1384 = vmatprep.mubr.f32.mxu0 0.0
    %1385 = vmatmul.mubr.f32.gmra.mrb[0].mxu0 %v1175
    %v1386 = vpop.f32.mrb[0].mxu0
    %v1387 = vadd.f32 0.0, %v1386
    %v1388 = vpop.f32.mrb[0].mxu0
    %1389 = vmatprep.mubr.f32.mxu0 0.0
    %1390 = vmatmul.mubr.f32.gmra.mrb[0].mxu0 %v1178
    %v1391 = vpop.f32.mrb[0].mxu0
    %v1392 = vadd.f32 0.0, %v1391
    %v1393 = vpop.f32.mrb[0].mxu0
    %1394 = vdwg.mxu0
    %vm1395 = vcmp.eq.f32.partialorder %v1367, 0.0
    %vm1396 = vcmp.eq.f32.partialorder %v1372, 0.0
    %vm1397 = vcmp.eq.f32.partialorder %v1377, 0.0
    %vm1398 = vcmp.eq.f32.partialorder %v1382, 0.0
    %vm1399 = vcmp.eq.f32.partialorder %v1387, 0.0
    %vm1400 = vcmp.eq.f32.partialorder %v1392, 0.0
    %s1401 = scalar_lea.vmem [#allocation9], 48
    %v1402 = vld [vmem:[%s1401] sm:$0xff]
    %v1403 = vld [vmem:[%s1401 + $0x8] sm:$0xff]
    %v1404 = vld [vmem:[%s1401 + $0x10] sm:$0xff]
    %v1405 = vld [vmem:[%s1401 + $0x18] sm:$0xff]
    %v1406 = vld [vmem:[%s1401 + $0x20] sm:$0xff]
    %v1407 = vld [vmem:[%s1401 + $0x28] sm:$0xff]
    %v1408 = vsel %vm1395, %v1402, %v1367
    %v1409 = vsel %vm1396, %v1403, %v1372
    %v1410 = vsel %vm1397, %v1404, %v1377
    %v1411 = vsel %vm1398, %v1405, %v1382
    %v1412 = vsel %vm1399, %v1406, %v1387
    %v1413 = vsel %vm1400, %v1407, %v1392
    %s1414 = scalar_lea.vmem [#allocation10], 48
    %1415 = vst.msk [vmem:[%s1414] sm:$0xff] %vm1293, %v1408
    %1416 = vst.msk [vmem:[%s1414 + $0x8] sm:$0xff] %vm1293, %v1409
    %1417 = vst.msk [vmem:[%s1414 + $0x10] sm:$0xff] %vm1293, %v1410
    %1418 = vst.msk [vmem:[%s1414 + $0x18] sm:$0xff] %vm1293, %v1411
    %1419 = vst.msk [vmem:[%s1414 + $0x20] sm:$0xff] %vm1293, %v1412
    %1420 = vst.msk [vmem:[%s1414 + $0x28] sm:$0xff] %vm1293, %v1413
    %1421 = vmatprep.subr.mxu0 0.0
    %1422 = vmatpush1.msra.mxu0 %v1138
    %1423 = vmatprep.subr.mxu0 0.0
    %1424 = vmatpush1.msra.mxu0 %v1143
    %1425 = vmatprep.subr.mxu0 0.0
    %1426 = vmatpush1.msra.mxu0 %v1148
    %1427 = vmatprep.subr.mxu0 0.0
    %1428 = vmatpush1.msra.mxu0 %v1153
    %1429 = vmatprep.subr.mxu0 0.0
    %1430 = vmatpush1.msra.mxu0 0.0
    %1431 = vmatprep.subr.mxu0 0.0
    %1432 = vmatpush1.msra.mxu0 0.0
    %1433 = vmatprep.subr.mxu0 0.0
    %1434 = vmatpush1.msra.mxu0 0.0
    %1435 = vmatprep.subr.mxu0 0.0
    %1436 = vmatpush1.msra.mxu0 0.0
    %1437 = vmatprep.subr.mxu0 0.0
    %1438 = vmatpush1.msra.mxu0 0.0
    %1439 = vmatprep.subr.mxu0 0.0
    %1440 = vmatpush1.msra.mxu0 0.0
    %1441 = vmatprep.subr.mxu0 0.0
    %1442 = vmatpush1.msra.mxu0 0.0
    %1443 = vmatprep.subr.mxu0 0.0
    %1444 = vmatpush1.msra.mxu0 0.0
    %1445 = vmatprep.subr.mxu0 0.0
    %1446 = vmatpush1.msra.mxu0 0.0
    %1447 = vmatprep.subr.mxu0 0.0
    %1448 = vmatpush1.msra.mxu0 0.0
    %1449 = vmatprep.subr.mxu0 0.0
    %1450 = vmatpush1.msra.mxu0 0.0
    %1451 = vmatprep.subr.mxu0 0.0
    %1452 = vmatpush1.msra.mxu0 0.0
    %1453 = vmatprep.subr.mxu0 0.0
    %1454 = vmatpush1.msra.mxu0 0.0
    %1455 = vmatprep.subr.mxu0 0.0
    %1456 = vmatpush1.msra.mxu0 0.0
    %1457 = vmatprep.subr.mxu0 0.0
    %1458 = vmatpush1.msra.mxu0 0.0
    %1459 = vmatprep.subr.mxu0 0.0
    %1460 = vmatpush1.msra.mxu0 0.0
    %1461 = vmatprep.subr.mxu0 0.0
    %1462 = vmatpush1.msra.mxu0 0.0
    %1463 = vmatprep.subr.mxu0 0.0
    %1464 = vmatpush1.msra.mxu0 0.0
    %1465 = vmatprep.subr.mxu0 0.0
    %1466 = vmatpush1.msra.mxu0 0.0
    %1467 = vmatprep.subr.mxu0 0.0
    %1468 = vmatpush1.msra.mxu0 0.0
    %1469 = vmatprep.subr.mxu0 0.0
    %1470 = vmatpush1.msra.mxu0 0.0
    %1471 = vmatprep.subr.mxu0 0.0
    %1472 = vmatpush1.msra.mxu0 0.0
    %1473 = vmatprep.subr.mxu0 0.0
    %1474 = vmatpush1.msra.mxu0 0.0
    %1475 = vmatprep.subr.mxu0 0.0
    %1476 = vmatpush1.msra.mxu0 0.0
    %1477 = vmatprep.subr.mxu0 0.0
    %1478 = vmatpush1.msra.mxu0 0.0
    %1479 = vmatprep.subr.mxu0 0.0
    %1480 = vmatpush1.msra.mxu0 0.0
    %1481 = vmatprep.subr.mxu0 0.0
    %1482 = vmatpush1.msra.mxu0 0.0
    %1483 = vmatprep.subr.mxu0 0.0
    %1484 = vmatpush1.msra.mxu0 0.0
    %1485 = vmatprep.mubr.f32.mxu0 0.0
    %1486 = vmatmul.mubr.f32.gmra.mrb[0].mxu0 %v1163
    %v1487 = vpop.f32.mrb[0].mxu0
    %v1488 = vadd.f32 0.0, %v1487
    %v1489 = vpop.f32.mrb[0].mxu0
    %1490 = vmatprep.mubr.f32.mxu0 0.0
    %1491 = vmatmul.mubr.f32.gmra.mrb[0].mxu0 %v1166
    %v1492 = vpop.f32.mrb[0].mxu0
    %v1493 = vadd.f32 0.0, %v1492
    %v1494 = vpop.f32.mrb[0].mxu0
    %1495 = vmatprep.mubr.f32.mxu0 0.0
    %1496 = vmatmul.mubr.f32.gmra.mrb[0].mxu0 %v1169
    %v1497 = vpop.f32.mrb[0].mxu0
    %v1498 = vadd.f32 0.0, %v1497
    %v1499 = vpop.f32.mrb[0].mxu0
    %1500 = vmatprep.mubr.f32.mxu0 0.0
    %1501 = vmatmul.mubr.f32.gmra.mrb[0].mxu0 %v1172
    %v1502 = vpop.f32.mrb[0].mxu0
    %v1503 = vadd.f32 0.0, %v1502
    %v1504 = vpop.f32.mrb[0].mxu0
    %1505 = vmatprep.mubr.f32.mxu0 0.0
    %1506 = vmatmul.mubr.f32.gmra.mrb[0].mxu0 %v1175
    %v1507 = vpop.f32.mrb[0].mxu0
    %v1508 = vadd.f32 0.0, %v1507
    %v1509 = vpop.f32.mrb[0].mxu0
    %1510 = vmatprep.mubr.f32.mxu0 0.0
    %1511 = vmatmul.mubr.f32.gmra.mrb[0].mxu0 %v1178
    %v1512 = vpop.f32.mrb[0].mxu0
    %v1513 = vadd.f32 0.0, %v1512
    %v1514 = vpop.f32.mrb[0].mxu0
    %1515 = vdwg.mxu0
    %vm1516 = vcmp.eq.f32.partialorder %v1488, 0.0
    %vm1517 = vcmp.eq.f32.partialorder %v1493, 0.0
    %vm1518 = vcmp.eq.f32.partialorder %v1498, 0.0
    %vm1519 = vcmp.eq.f32.partialorder %v1503, 0.0
    %vm1520 = vcmp.eq.f32.partialorder %v1508, 0.0
    %vm1521 = vcmp.eq.f32.partialorder %v1513, 0.0
    %s1522 = scalar_lea.vmem [#allocation9], 96
    %v1523 = vld [vmem:[%s1522] sm:$0xff]
    %v1524 = vld [vmem:[%s1522 + $0x8] sm:$0xff]
    %v1525 = vld [vmem:[%s1522 + $0x10] sm:$0xff]
    %v1526 = vld [vmem:[%s1522 + $0x18] sm:$0xff]
    %v1527 = vld [vmem:[%s1522 + $0x20] sm:$0xff]
    %v1528 = vld [vmem:[%s1522 + $0x28] sm:$0xff]
    %v1529 = vsel %vm1516, %v1523, %v1488
    %v1530 = vsel %vm1517, %v1524, %v1493
    %v1531 = vsel %vm1518, %v1525, %v1498
    %v1532 = vsel %vm1519, %v1526, %v1503
    %v1533 = vsel %vm1520, %v1527, %v1508
    %v1534 = vsel %vm1521, %v1528, %v1513
    %s1535 = scalar_lea.vmem [#allocation10], 96
    %1536 = vst.msk [vmem:[%s1535] sm:$0xff] %vm1293, %v1529
    %1537 = vst.msk [vmem:[%s1535 + $0x8] sm:$0xff] %vm1293, %v1530
    %1538 = vst.msk [vmem:[%s1535 + $0x10] sm:$0xff] %vm1293, %v1531
    %1539 = vst.msk [vmem:[%s1535 + $0x18] sm:$0xff] %vm1293, %v1532
    %1540 = vst.msk [vmem:[%s1535 + $0x20] sm:$0xff] %vm1293, %v1533
    %1541 = vst.msk [vmem:[%s1535 + $0x28] sm:$0xff] %vm1293, %v1534
    // Predicated region
    $region46: #{tpu_custom_call.1} parent=1 // pred_check
      _
    $region47: #{tpu_custom_call.1} parent=1 // pred_check_branch
      %1543 = sbr.rel (0) target = $region49
    $region48: #{tpu_custom_call.1} parent=1 // pred_region
      %s1545 = ssub.s32 2304, 2304
      %1546 = vsyncadd [#allocation4], %s1545
      %s1547 = sshll.u32 [#allocation10], 4
      %s1548 = int_to_ptr.vmem [resolvable:$true] %s1547
      %1553 = dma.vmem_to_hbm [thread:$0]  %s1548, 2304, %s7, [#allocation4], 128, 128, 8
    $region49: #{tpu_custom_call.1} parent=1 // pred_fallthru
      _
    // Predicated region
    $region50: #{tpu_custom_call.1} parent=1 // pred_check
      _
    $region51: #{tpu_custom_call.1} parent=1 // pred_check_branch
      %1555 = sbr.rel (0) target = $region53
    $region52: #{tpu_custom_call.1} parent=1 // pred_region
      %1556 = dma.done [#allocation4], 2304
    $region53: #{tpu_custom_call.1} parent=1 // pred_fallthru
      _
    %1557 = vsyncpa [#allocation3], 1
    %1558 = vsyncpa [#allocation8], 1
    %1559 = vsyncpa [#allocation4], 1
    %1560 = vsyncpa [#allocation5], 1

</llo_original>
